<compile_context>
chip_gen: v7x
topology: tpu7x:2x2x1
jax: 0.10.0
libtpu: 0.0.40
codegen_flags: <defaults>
</compile_context>

<pallas_src>
import functools

import jax
import jax.numpy as jnp
from jax.experimental import pallas as pl
from jax.experimental.pallas import tpu as pltpu


def actor_kernel(x_ref, w_ref, b_ref, o_ref, *, num_layers, state_pad):
    """One (tm, P) batch tile of the full MLP.

    x_ref: (tm, state_pad) f32  -- activation tile, streamed over the batch grid
    w_ref: (L+2, P, P)     bf16 -- packed (in, out) weights, VMEM-resident
    b_ref: (L+2, 1, P)     f32  -- packed biases
    o_ref: (tm, P)         f32  -- lane-dense padded logits
    """
    # Input layer: contract only over the (sublane-aligned) real input features.
    h = jnp.dot(x_ref[...].astype(jnp.bfloat16),
                w_ref[0, :state_pad, :],
                preferred_element_type=jnp.float32)
    h = jnp.maximum(h + b_ref[0], 0.0)

    # Hidden layers (static unroll: num_layers is a Python int).
    for l in range(1, num_layers + 1):
        h = jnp.dot(h.astype(jnp.bfloat16), w_ref[l],
                    preferred_element_type=jnp.float32)
        h = jnp.maximum(h + b_ref[l], 0.0)

    # Output layer: logits, no activation.
    logits = jnp.dot(h.astype(jnp.bfloat16), w_ref[num_layers + 1],
                     preferred_element_type=jnp.float32)
    o_ref[...] = logits + b_ref[num_layers + 1]


def pack_params(params, *, state_size, action_size, num_layers, hidden_size, pad):
    """Pack per-layer (in, out) weights / biases into one padded bf16 weight
    stack and one f32 bias stack.  Zero padding is numerically inert
    (relu(0) = 0 propagates; padded K-rows multiply padded-zero activations)."""
    w_in, b_in, w_hid, b_hid, w_out, b_out = params
    n_total = num_layers + 2
    w_packed = jnp.zeros((n_total, pad, pad), jnp.float32)
    b_packed = jnp.zeros((n_total, 1, pad), jnp.float32)

    w_packed = w_packed.at[0, :state_size, :hidden_size].set(w_in)
    b_packed = b_packed.at[0, :, :hidden_size].set(b_in)
    w_packed = w_packed.at[1:num_layers + 1, :hidden_size, :hidden_size].set(w_hid)
    b_packed = b_packed.at[1:num_layers + 1, :, :hidden_size].set(b_hid)
    w_packed = w_packed.at[num_layers + 1, :hidden_size, :action_size].set(w_out)
    b_packed = b_packed.at[num_layers + 1, :, :action_size].set(b_out)
    return w_packed.astype(jnp.bfloat16), b_packed


@functools.partial(jax.jit, static_argnames=("num_layers", "action_size", "tm"))
def actor_forward(x, w_packed, b_packed, *, num_layers, action_size, tm=256):
    """Run the packed MLP; returns [batch, action_size] f32 logits."""
    batch, state_size = x.shape
    n_total, pad, _ = w_packed.shape
    assert n_total == num_layers + 2

    # Batch tile: multiple of 8 sublanes, clamped to the (rounded-up) batch.
    tm_eff = min(tm, 8 * pl.cdiv(batch, 8))
    batch_pad = tm_eff * pl.cdiv(batch, tm_eff)
    state_pad = 8 * pl.cdiv(state_size, 8)

    # Only pad the cheap batch / sublane remainder of the input; 128-lane
    # feature padding lives entirely inside the packed weights.
    if (batch_pad, state_pad) != (batch, state_size):
        x = jnp.zeros((batch_pad, state_pad), x.dtype).at[:batch, :state_size].set(x)

    kernel = functools.partial(actor_kernel, num_layers=num_layers,
                               state_pad=state_pad)

    out = pl.pallas_call(
        kernel,
        out_shape=jax.ShapeDtypeStruct((batch_pad, pad), jnp.float32),
        grid=(batch_pad // tm_eff,),
        in_specs=[
            # Activation tile streams over the batch grid at native width.
            pl.BlockSpec((tm_eff, state_pad), lambda i: (i, 0)),
            # Constant index_map -> packed weights/biases DMA'd once per call
            # and VMEM-resident across all grid steps (~260 KiB total).
            pl.BlockSpec((n_total, pad, pad), lambda i: (0, 0, 0)),
            pl.BlockSpec((n_total, 1, pad), lambda i: (0, 0, 0)),
        ],
        out_specs=pl.BlockSpec((tm_eff, pad), lambda i: (i, 0)),
        compiler_params=pltpu.CompilerParams(
            dimension_semantics=("parallel",)),  # batch grid shards over v7x TCs
    )(x, w_packed, b_packed)

    # Lane-dense (pad-wide) stores in the kernel; this narrow slice fuses into
    # the same jitted program instead of a second standalone HBM pass.
    return out[:batch, :action_size]


def init_params(key, state_size, action_size, num_layers, hidden_size):
    """Deterministic synthetic init mimicking PyTorch's U(-1/sqrt(fan_in), ...)."""
    keys = jax.random.split(key, 6)

    def u(k, shape, fan_in):
        bound = 1.0 / jnp.sqrt(fan_in)
        return jax.random.uniform(k, shape, jnp.float32, -bound, bound)

    w_in = u(keys[0], (state_size, hidden_size), state_size)
    b_in = u(keys[1], (1, hidden_size), state_size)
    w_hid = u(keys[2], (num_layers, hidden_size, hidden_size), hidden_size)
    b_hid = u(keys[3], (num_layers, 1, hidden_size), hidden_size)
    w_out = u(keys[4], (hidden_size, action_size), hidden_size)
    b_out = u(keys[5], (1, action_size), hidden_size)
    return (w_in, b_in, w_hid, b_hid, w_out, b_out)


def actor_reference(x, params, *, num_layers, mm_dtype=jnp.float32):
    """Pure-JAX reference identical to the PyTorch forward pass.  mm_dtype
    selects the matmul operand precision (f32 semantic check / bf16 exact-path
    check matching the kernel)."""
    w_in, b_in, w_hid, b_hid, w_out, b_out = params

    def mm(a, w):
        return jnp.dot(a.astype(mm_dtype), w.astype(mm_dtype),
                       preferred_element_type=jnp.float32)

    h = jnp.maximum(mm(x, w_in) + b_in, 0.0)
    for i in range(num_layers):
        h = jnp.maximum(mm(h, w_hid[i]) + b_hid[i], 0.0)
    return mm(h, w_out) + b_out


if __name__ == "__main__":
    # Shapes consistent with the module (hidden scaled down from 256), with a
    # batch large enough for 2 grid steps at tm=256 (exercises the batch
    # pipeline and, on v7x, both TensorCores).
    batch = 512
    state_size = 8
    action_size = 4
    num_layers = 6
    hidden_size = 32
    tm = 256                   # batch tile (multiple of 8; fills MXU rows)

    # Feature dims padded to the 128-lane width inside the packed weights.
    pad = 128 * pl.cdiv(max(state_size, hidden_size, action_size), 128)

    key = jax.random.PRNGKey(0)
    pkey, xkey = jax.random.split(key)

    params = init_params(pkey, state_size, action_size, num_layers, hidden_size)
    w_packed, b_packed = pack_params(
        params, state_size=state_size, action_size=action_size,
        num_layers=num_layers, hidden_size=hidden_size, pad=pad)

    x = jax.random.normal(xkey, (batch, state_size), jnp.float32)

    logits = actor_forward(x, w_packed, b_packed,
                           num_layers=num_layers, action_size=action_size, tm=tm)
    logits = jax.block_until_ready(logits)
    assert logits.shape == (batch, action_size)

    # Tight check against a reference using the same bf16 matmul path...
    ref_bf16 = actor_reference(x, params, num_layers=num_layers,
                               mm_dtype=jnp.bfloat16)
    assert jnp.allclose(logits, ref_bf16, atol=1e-3, rtol=1e-3), \
        "mismatch vs bf16-path reference"
    # ...and a looser semantic check against the full-f32 reference.
    ref_f32 = actor_reference(x, params, num_layers=num_layers,
                              mm_dtype=jnp.float32)
    assert jnp.allclose(logits, ref_f32, atol=3e-2, rtol=3e-2), \
        "mismatch vs f32 reference"

    # TODO(synk): evaluate()/get_action() (Categorical sampling) are host-side
    # policy utilities, not part of the forward pass; use jax.random outside.
    print("KERNEL_OK")
</pallas_src>

<mosaic_0001>
module attributes {stable_mosaic.version = 11 : i64} {
  func.func @actor_kernel(%arg0: i32, %arg1: memref<256x8xf32, #tpu.memory_space<vmem>>, %arg2: memref<8x128x128xbf16, #tpu.memory_space<vmem>>, %arg3: memref<8x1x128xf32, #tpu.memory_space<vmem>>, %arg4: memref<256x128xf32, #tpu.memory_space<vmem>>) attributes {dimension_semantics = [#tpu.dimension_semantics<parallel>], iteration_bounds = array<i64: 2>, scalar_prefetch = 0 : i64, scratch_operands = 0 : i64, tpu.core_type = #tpu.core_type<tc>, window_params = [{transform_indices = @transform_0, window_bounds = array<i64: 256, 8>}, {pipeline_mode = #tpu.pipeline_mode<synchronous>, transform_indices = @transform_1, window_bounds = array<i64: 8, 128, 128>}, {pipeline_mode = #tpu.pipeline_mode<synchronous>, transform_indices = @transform_2, window_bounds = array<i64: 8, 1, 128>}, {transform_indices = @transform_3, window_bounds = array<i64: 256, 128>}]} {
    %c0 = arith.constant 0 : index
    %c0_0 = arith.constant 0 : index
    %0 = vector.load %arg1[%c0, %c0_0] : memref<256x8xf32, #tpu.memory_space<vmem>>, vector<256x8xf32>
    %1 = arith.truncf %0 : vector<256x8xf32> to vector<256x8xbf16>
    %c0_1 = arith.constant 0 : index
    %c0_2 = arith.constant 0 : index
    %c0_3 = arith.constant 0 : index
    %2 = vector.load %arg2[%c0_1, %c0_2, %c0_3] : memref<8x128x128xbf16, #tpu.memory_space<vmem>>, vector<1x8x128xbf16>
    %3 = vector.shape_cast %2 : vector<1x8x128xbf16> to vector<8x128xbf16>
    %cst = arith.constant dense<0.000000e+00> : vector<256x128xf32>
    %4 = tpu.matmul %1, %3, %cst {dimension_numbers = #tpu.dot_dimension_numbers<[1], [0], [0], [1], [0, 0, 1, 1], [], []>} : vector<256x8xbf16>, vector<8x128xbf16>, vector<256x128xf32> -> vector<256x128xf32>
    %c0_4 = arith.constant 0 : index
    %c0_5 = arith.constant 0 : index
    %c0_6 = arith.constant 0 : index
    %5 = vector.load %arg3[%c0_4, %c0_5, %c0_6] : memref<8x1x128xf32, #tpu.memory_space<vmem>>, vector<1x1x128xf32>
    %6 = vector.shape_cast %5 : vector<1x1x128xf32> to vector<1x128xf32>
    %7 = vector.broadcast %6 : vector<1x128xf32> to vector<256x128xf32>
    %8 = arith.addf %4, %7 : vector<256x128xf32>
    %cst_7 = arith.constant 0.000000e+00 : f32
    %9 = vector.broadcast %cst_7 : f32 to vector<256x128xf32>
    %10 = arith.maximumf %8, %9 : vector<256x128xf32>
    %11 = arith.truncf %10 : vector<256x128xf32> to vector<256x128xbf16>
    %c1 = arith.constant 1 : index
    %c0_8 = arith.constant 0 : index
    %c0_9 = arith.constant 0 : index
    %12 = vector.load %arg2[%c1, %c0_8, %c0_9] : memref<8x128x128xbf16, #tpu.memory_space<vmem>>, vector<1x128x128xbf16>
    %13 = vector.shape_cast %12 : vector<1x128x128xbf16> to vector<128x128xbf16>
    %cst_10 = arith.constant dense<0.000000e+00> : vector<256x128xf32>
    %14 = tpu.matmul %11, %13, %cst_10 {dimension_numbers = #tpu.dot_dimension_numbers<[1], [0], [0], [1], [0, 0, 1, 1], [], []>} : vector<256x128xbf16>, vector<128x128xbf16>, vector<256x128xf32> -> vector<256x128xf32>
    %c1_11 = arith.constant 1 : index
    %c0_12 = arith.constant 0 : index
    %c0_13 = arith.constant 0 : index
    %15 = vector.load %arg3[%c1_11, %c0_12, %c0_13] : memref<8x1x128xf32, #tpu.memory_space<vmem>>, vector<1x1x128xf32>
    %16 = vector.shape_cast %15 : vector<1x1x128xf32> to vector<1x128xf32>
    %17 = vector.broadcast %16 : vector<1x128xf32> to vector<256x128xf32>
    %18 = arith.addf %14, %17 : vector<256x128xf32>
    %cst_14 = arith.constant 0.000000e+00 : f32
    %19 = vector.broadcast %cst_14 : f32 to vector<256x128xf32>
    %20 = arith.maximumf %18, %19 : vector<256x128xf32>
    %21 = arith.truncf %20 : vector<256x128xf32> to vector<256x128xbf16>
    %c2 = arith.constant 2 : index
    %c0_15 = arith.constant 0 : index
    %c0_16 = arith.constant 0 : index
    %22 = vector.load %arg2[%c2, %c0_15, %c0_16] : memref<8x128x128xbf16, #tpu.memory_space<vmem>>, vector<1x128x128xbf16>
    %23 = vector.shape_cast %22 : vector<1x128x128xbf16> to vector<128x128xbf16>
    %cst_17 = arith.constant dense<0.000000e+00> : vector<256x128xf32>
    %24 = tpu.matmul %21, %23, %cst_17 {dimension_numbers = #tpu.dot_dimension_numbers<[1], [0], [0], [1], [0, 0, 1, 1], [], []>} : vector<256x128xbf16>, vector<128x128xbf16>, vector<256x128xf32> -> vector<256x128xf32>
    %c2_18 = arith.constant 2 : index
    %c0_19 = arith.constant 0 : index
    %c0_20 = arith.constant 0 : index
    %25 = vector.load %arg3[%c2_18, %c0_19, %c0_20] : memref<8x1x128xf32, #tpu.memory_space<vmem>>, vector<1x1x128xf32>
    %26 = vector.shape_cast %25 : vector<1x1x128xf32> to vector<1x128xf32>
    %27 = vector.broadcast %26 : vector<1x128xf32> to vector<256x128xf32>
    %28 = arith.addf %24, %27 : vector<256x128xf32>
    %cst_21 = arith.constant 0.000000e+00 : f32
    %29 = vector.broadcast %cst_21 : f32 to vector<256x128xf32>
    %30 = arith.maximumf %28, %29 : vector<256x128xf32>
    %31 = arith.truncf %30 : vector<256x128xf32> to vector<256x128xbf16>
    %c3 = arith.constant 3 : index
    %c0_22 = arith.constant 0 : index
    %c0_23 = arith.constant 0 : index
    %32 = vector.load %arg2[%c3, %c0_22, %c0_23] : memref<8x128x128xbf16, #tpu.memory_space<vmem>>, vector<1x128x128xbf16>
    %33 = vector.shape_cast %32 : vector<1x128x128xbf16> to vector<128x128xbf16>
    %cst_24 = arith.constant dense<0.000000e+00> : vector<256x128xf32>
    %34 = tpu.matmul %31, %33, %cst_24 {dimension_numbers = #tpu.dot_dimension_numbers<[1], [0], [0], [1], [0, 0, 1, 1], [], []>} : vector<256x128xbf16>, vector<128x128xbf16>, vector<256x128xf32> -> vector<256x128xf32>
    %c3_25 = arith.constant 3 : index
    %c0_26 = arith.constant 0 : index
    %c0_27 = arith.constant 0 : index
    %35 = vector.load %arg3[%c3_25, %c0_26, %c0_27] : memref<8x1x128xf32, #tpu.memory_space<vmem>>, vector<1x1x128xf32>
    %36 = vector.shape_cast %35 : vector<1x1x128xf32> to vector<1x128xf32>
    %37 = vector.broadcast %36 : vector<1x128xf32> to vector<256x128xf32>
    %38 = arith.addf %34, %37 : vector<256x128xf32>
    %cst_28 = arith.constant 0.000000e+00 : f32
    %39 = vector.broadcast %cst_28 : f32 to vector<256x128xf32>
    %40 = arith.maximumf %38, %39 : vector<256x128xf32>
    %41 = arith.truncf %40 : vector<256x128xf32> to vector<256x128xbf16>
    %c4 = arith.constant 4 : index
    %c0_29 = arith.constant 0 : index
    %c0_30 = arith.constant 0 : index
    %42 = vector.load %arg2[%c4, %c0_29, %c0_30] : memref<8x128x128xbf16, #tpu.memory_space<vmem>>, vector<1x128x128xbf16>
    %43 = vector.shape_cast %42 : vector<1x128x128xbf16> to vector<128x128xbf16>
    %cst_31 = arith.constant dense<0.000000e+00> : vector<256x128xf32>
    %44 = tpu.matmul %41, %43, %cst_31 {dimension_numbers = #tpu.dot_dimension_numbers<[1], [0], [0], [1], [0, 0, 1, 1], [], []>} : vector<256x128xbf16>, vector<128x128xbf16>, vector<256x128xf32> -> vector<256x128xf32>
    %c4_32 = arith.constant 4 : index
    %c0_33 = arith.constant 0 : index
    %c0_34 = arith.constant 0 : index
    %45 = vector.load %arg3[%c4_32, %c0_33, %c0_34] : memref<8x1x128xf32, #tpu.memory_space<vmem>>, vector<1x1x128xf32>
    %46 = vector.shape_cast %45 : vector<1x1x128xf32> to vector<1x128xf32>
    %47 = vector.broadcast %46 : vector<1x128xf32> to vector<256x128xf32>
    %48 = arith.addf %44, %47 : vector<256x128xf32>
    %cst_35 = arith.constant 0.000000e+00 : f32
    %49 = vector.broadcast %cst_35 : f32 to vector<256x128xf32>
    %50 = arith.maximumf %48, %49 : vector<256x128xf32>
    %51 = arith.truncf %50 : vector<256x128xf32> to vector<256x128xbf16>
    %c5 = arith.constant 5 : index
    %c0_36 = arith.constant 0 : index
    %c0_37 = arith.constant 0 : index
    %52 = vector.load %arg2[%c5, %c0_36, %c0_37] : memref<8x128x128xbf16, #tpu.memory_space<vmem>>, vector<1x128x128xbf16>
    %53 = vector.shape_cast %52 : vector<1x128x128xbf16> to vector<128x128xbf16>
    %cst_38 = arith.constant dense<0.000000e+00> : vector<256x128xf32>
    %54 = tpu.matmul %51, %53, %cst_38 {dimension_numbers = #tpu.dot_dimension_numbers<[1], [0], [0], [1], [0, 0, 1, 1], [], []>} : vector<256x128xbf16>, vector<128x128xbf16>, vector<256x128xf32> -> vector<256x128xf32>
    %c5_39 = arith.constant 5 : index
    %c0_40 = arith.constant 0 : index
    %c0_41 = arith.constant 0 : index
    %55 = vector.load %arg3[%c5_39, %c0_40, %c0_41] : memref<8x1x128xf32, #tpu.memory_space<vmem>>, vector<1x1x128xf32>
    %56 = vector.shape_cast %55 : vector<1x1x128xf32> to vector<1x128xf32>
    %57 = vector.broadcast %56 : vector<1x128xf32> to vector<256x128xf32>
    %58 = arith.addf %54, %57 : vector<256x128xf32>
    %cst_42 = arith.constant 0.000000e+00 : f32
    %59 = vector.broadcast %cst_42 : f32 to vector<256x128xf32>
    %60 = arith.maximumf %58, %59 : vector<256x128xf32>
    %61 = arith.truncf %60 : vector<256x128xf32> to vector<256x128xbf16>
    %c6 = arith.constant 6 : index
    %c0_43 = arith.constant 0 : index
    %c0_44 = arith.constant 0 : index
    %62 = vector.load %arg2[%c6, %c0_43, %c0_44] : memref<8x128x128xbf16, #tpu.memory_space<vmem>>, vector<1x128x128xbf16>
    %63 = vector.shape_cast %62 : vector<1x128x128xbf16> to vector<128x128xbf16>
    %cst_45 = arith.constant dense<0.000000e+00> : vector<256x128xf32>
    %64 = tpu.matmul %61, %63, %cst_45 {dimension_numbers = #tpu.dot_dimension_numbers<[1], [0], [0], [1], [0, 0, 1, 1], [], []>} : vector<256x128xbf16>, vector<128x128xbf16>, vector<256x128xf32> -> vector<256x128xf32>
    %c6_46 = arith.constant 6 : index
    %c0_47 = arith.constant 0 : index
    %c0_48 = arith.constant 0 : index
    %65 = vector.load %arg3[%c6_46, %c0_47, %c0_48] : memref<8x1x128xf32, #tpu.memory_space<vmem>>, vector<1x1x128xf32>
    %66 = vector.shape_cast %65 : vector<1x1x128xf32> to vector<1x128xf32>
    %67 = vector.broadcast %66 : vector<1x128xf32> to vector<256x128xf32>
    %68 = arith.addf %64, %67 : vector<256x128xf32>
    %cst_49 = arith.constant 0.000000e+00 : f32
    %69 = vector.broadcast %cst_49 : f32 to vector<256x128xf32>
    %70 = arith.maximumf %68, %69 : vector<256x128xf32>
    %71 = arith.truncf %70 : vector<256x128xf32> to vector<256x128xbf16>
    %c7 = arith.constant 7 : index
    %c0_50 = arith.constant 0 : index
    %c0_51 = arith.constant 0 : index
    %72 = vector.load %arg2[%c7, %c0_50, %c0_51] : memref<8x128x128xbf16, #tpu.memory_space<vmem>>, vector<1x128x128xbf16>
    %73 = vector.shape_cast %72 : vector<1x128x128xbf16> to vector<128x128xbf16>
    %cst_52 = arith.constant dense<0.000000e+00> : vector<256x128xf32>
    %74 = tpu.matmul %71, %73, %cst_52 {dimension_numbers = #tpu.dot_dimension_numbers<[1], [0], [0], [1], [0, 0, 1, 1], [], []>} : vector<256x128xbf16>, vector<128x128xbf16>, vector<256x128xf32> -> vector<256x128xf32>
    %c7_53 = arith.constant 7 : index
    %c0_54 = arith.constant 0 : index
    %c0_55 = arith.constant 0 : index
    %75 = vector.load %arg3[%c7_53, %c0_54, %c0_55] : memref<8x1x128xf32, #tpu.memory_space<vmem>>, vector<1x1x128xf32>
    %76 = vector.shape_cast %75 : vector<1x1x128xf32> to vector<1x128xf32>
    %77 = vector.broadcast %76 : vector<1x128xf32> to vector<256x128xf32>
    %78 = arith.addf %74, %77 : vector<256x128xf32>
    %c0_56 = arith.constant 0 : index
    %c0_57 = arith.constant 0 : index
    %79 = vector.load %arg4[%c0_56, %c0_57] : memref<256x128xf32, #tpu.memory_space<vmem>>, vector<256x128xf32>
    tpu.vector_store %arg4[%c0_56, %c0_57], %78 {strides = array<i32>} : memref<256x128xf32, #tpu.memory_space<vmem>>, vector<256x128xf32>,
    return
  }
  func.func @transform_0(%arg0: i32) -> (i32, i32) {
    %c0_i32 = arith.constant 0 : i32
    %c0_i32_0 = arith.constant 0 : i32
    return %arg0, %c0_i32 : i32, i32
  }
  func.func @transform_1(%arg0: i32) -> (i32, i32, i32) {
    %c0_i32 = arith.constant 0 : i32
    %c0_i32_0 = arith.constant 0 : i32
    %c0_i32_1 = arith.constant 0 : i32
    %c0_i32_2 = arith.constant 0 : i32
    return %c0_i32, %c0_i32_0, %c0_i32_1 : i32, i32, i32
  }
  func.func @transform_2(%arg0: i32) -> (i32, i32, i32) {
    %c0_i32 = arith.constant 0 : i32
    %c0_i32_0 = arith.constant 0 : i32
    %c0_i32_1 = arith.constant 0 : i32
    %c0_i32_2 = arith.constant 0 : i32
    return %c0_i32, %c0_i32_0, %c0_i32_1 : i32, i32, i32
  }
  func.func @transform_3(%arg0: i32) -> (i32, i32) {
    %c0_i32 = arith.constant 0 : i32
    %c0_i32_0 = arith.constant 0 : i32
    return %arg0, %c0_i32 : i32, i32
  }
}

</mosaic_0001>

<llo_original>
// kernel: actor_forward.1
$region0: #{actor_forward.1}
  #allocation0 [shape = 'u32[]', space=smem, size = 0x4, offset = 0x4, fixed_abs, tag = 'smem constant byte address 0x4 - core index']
  #allocation1 [shape = 'u32[144,128]{1,0:T(1,128)}', space=vmem, size = 0x12000, scoped, tag = 'internal scratch']
  %s0 = inlined_call_operand.vmem [shape: f32[512,8], index: 0, kind: input, shape index: {}]
  %s1 = inlined_call_operand.vmem [shape: bf16[8,128,128], index: 1, kind: input, shape index: {}]
  %s2 = inlined_call_operand.vmem [shape: f32[8,1,128], index: 2, kind: input, shape index: {}]
  %s3 = inlined_call_operand.vmem [shape: f32[512,128], index: 3, kind: output, shape index: {}]
  %s4 = sld [smem:[#allocation0]]
  $region45: #{actor_forward.1} parent=0
    _
  %s6 = ssub.s32 1, %s4
  %s7 = scalar_select 0, %s6, %s4
  loop: start=0, step=1, limit=4
  $region2: #{actor_forward.1} parent=0 // loop_pre_header
    _
  $region3: #{actor_forward.1} parent=0 // loop_header
    %s9 = sphi 0, %s13
    %p10 = scmp.ge.s32.totalorder %s9, 4
    %s19 = sphi 0, %s21
    %s22 = sphi 0, %s19
    %s23 = sphi 0, %s22
    %s39 = sphi 0, %s23
    %s43 = sphi 0, %s43
    %s45 = sphi 0, %s43
    %s46 = sphi 0, %s45
    %s60 = sphi 0, %s46
    %s64 = sphi 0, %s64
    %s66 = sphi 0, %s64
    %s67 = sphi 0, %s66
    %s81 = sphi 0, %s67
    %s87 = sphi 0, %s89
    %s90 = sphi 0, %s87
    %s91 = sphi 0, %s90
    %s107 = sphi 0, %s91
  $region4: #{actor_forward.1} parent=0 // loop_header_branch
    %12 = sbr.rel (%p10) target = $region8
  $region5: #{actor_forward.1} parent=0 // loop_body
    %s14 = ssub.s32 %s9, 1
    %s15 = ssub.s32 %s9, 2
    %s16 = sadd.s32 %s9, 1
    %s17 = ssub.s32 %s9, %s16
    %p18 = scmp.eq.s32.totalorder %s17, 0
    %s20 = sadd.s32 %s19, 1
    %s21 = scalar_select %p18, %s19, %s20
    %p24 = pneg %p18
    %p25 = scmp.eq.s32.totalorder %s9, 1
    %p26 = por %p24, %p25
    %p27 = scmp.ne.s32.totalorder %s19, %s22
    %p28 = scmp.eq.s32.totalorder %s9, 0
    %p29 = por %p27, %p28
    %p30 = scmp.ne.s32.totalorder %s19, %s22
    %p31 = scmp.eq.s32.totalorder %s14, 1
    %p32 = por %p30, %p31
    %p33 = scmp.ne.s32.totalorder %s22, %s23
    %p34 = scmp.eq.s32.totalorder %s14, 0
    %p35 = por %p33, %p34
    %p36 = scmp.ne.s32.totalorder %s22, %s23
    %p37 = scmp.eq.s32.totalorder %s15, 1
    %p38 = por %p36, %p37
    %p40 = scmp.ne.s32.totalorder %s23, %s39
    %p41 = scmp.eq.s32.totalorder %s15, 0
    %p42 = por %p40, %p41
    %s44 = sadd.s32 %s43, 1
    %p47 = scmp.eq.s32.totalorder %s9, 1
    %p48 = scmp.ne.s32.totalorder %s43, %s45
    %p49 = scmp.eq.s32.totalorder %s9, 0
    %p50 = por %p48, %p49
    %p51 = scmp.ne.s32.totalorder %s43, %s45
    %p52 = scmp.eq.s32.totalorder %s14, 1
    %p53 = por %p51, %p52
    %p54 = scmp.ne.s32.totalorder %s45, %s46
    %p55 = scmp.eq.s32.totalorder %s14, 0
    %p56 = por %p54, %p55
    %p57 = scmp.ne.s32.totalorder %s45, %s46
    %p58 = scmp.eq.s32.totalorder %s15, 1
    %p59 = por %p57, %p58
    %p61 = scmp.ne.s32.totalorder %s46, %s60
    %p62 = scmp.eq.s32.totalorder %s15, 0
    %p63 = por %p61, %p62
    %s65 = sadd.s32 %s64, 1
    %p68 = scmp.eq.s32.totalorder %s9, 1
    %p69 = scmp.ne.s32.totalorder %s64, %s66
    %p70 = scmp.eq.s32.totalorder %s9, 0
    %p71 = por %p69, %p70
    %p72 = scmp.ne.s32.totalorder %s64, %s66
    %p73 = scmp.eq.s32.totalorder %s14, 1
    %p74 = por %p72, %p73
    %p75 = scmp.ne.s32.totalorder %s66, %s67
    %p76 = scmp.eq.s32.totalorder %s14, 0
    %p77 = por %p75, %p76
    %p78 = scmp.ne.s32.totalorder %s66, %s67
    %p79 = scmp.eq.s32.totalorder %s15, 1
    %p80 = por %p78, %p79
    %p82 = scmp.ne.s32.totalorder %s67, %s81
    %p83 = scmp.eq.s32.totalorder %s15, 0
    %p84 = por %p82, %p83
    %s85 = ssub.s32 %s9, %s16
    %p86 = scmp.eq.s32.totalorder %s85, 0
    %s88 = sadd.s32 %s87, 1
    %s89 = scalar_select %p86, %s87, %s88
    %p92 = pneg %p86
    %p93 = scmp.eq.s32.totalorder %s9, 1
    %p94 = por %p92, %p93
    %p95 = scmp.ne.s32.totalorder %s87, %s90
    %p96 = scmp.eq.s32.totalorder %s9, 0
    %p97 = por %p95, %p96
    %p98 = scmp.ne.s32.totalorder %s87, %s90
    %p99 = scmp.eq.s32.totalorder %s14, 1
    %p100 = por %p98, %p99
    %p101 = scmp.ne.s32.totalorder %s90, %s91
    %p102 = scmp.eq.s32.totalorder %s14, 0
    %p103 = por %p101, %p102
    %p104 = scmp.ne.s32.totalorder %s90, %s91
    %p105 = scmp.eq.s32.totalorder %s15, 1
    %p106 = por %p104, %p105
    %p108 = scmp.ne.s32.totalorder %s91, %s107
    %p109 = scmp.eq.s32.totalorder %s15, 0
    %p110 = por %p108, %p109
    %p111 = scmp.le.s32.totalorder 1, %s9
    %p112 = scmp.lt.s32.totalorder %s9, 3
    %p113 = pnand %p111, %p112
    %p114 = pneg %p113
    // Predicated region
    $region9: #{actor_forward.1} parent=5 // pred_check
      _
    $region10: #{actor_forward.1} parent=5 // pred_check_branch
      %116 = sbr.rel (%p113) target = $region12
    $region11: #{actor_forward.1} parent=5 // pred_region
      %s117 = ssub.s32 %s9, 1
      // Predicated region
      $region13: #{actor_forward.1} parent=11 // pred_check
        %p118 = pneg %p56
      $region14: #{actor_forward.1} parent=11 // pred_check_branch
        %120 = sbr.rel (%p118) target = $region16
      $region15: #{actor_forward.1} parent=11 // pred_region
        _
      $region16: #{actor_forward.1} parent=11 // pred_fallthru
        _
      // Predicated region
      $region17: #{actor_forward.1} parent=11 // pred_check
        %p121 = pneg %p77
      $region18: #{actor_forward.1} parent=11 // pred_check_branch
        %123 = sbr.rel (%p121) target = $region20
      $region19: #{actor_forward.1} parent=11 // pred_region
        _
      $region20: #{actor_forward.1} parent=11 // pred_fallthru
        _
    $region12: #{actor_forward.1} parent=5 // pred_fallthru
      _
    %p124 = scmp.lt.s32.totalorder %s9, 2
    // Predicated region
    $region21: #{actor_forward.1} parent=5 // pred_check
      %p125 = pneg %p124
    $region22: #{actor_forward.1} parent=5 // pred_check_branch
      %127 = sbr.rel (%p125) target = $region24
    $region23: #{actor_forward.1} parent=5 // pred_region
      // Predicated region
      $region25: #{actor_forward.1} parent=23 // pred_check
        %p128 = pneg %p29
      $region26: #{actor_forward.1} parent=23 // pred_check_branch
        %130 = sbr.rel (%p128) target = $region28
      $region27: #{actor_forward.1} parent=23 // pred_region
        %s131 = smul.u32 32, %s9
        %p132 = scmp.lt.s32.totalorder %s131, 63
        %s133 = scalar_select %p132, %s131, 63
        %s134 = smul.addr %s133, 8
        %s135 = scalar_lea.vmem %s0, %s134
        %s136 = smul.u32 32, %s9
      $region28: #{actor_forward.1} parent=23 // pred_fallthru
        _
    $region24: #{actor_forward.1} parent=5 // pred_fallthru
      _
    %p137 = scmp.le.s32.totalorder 1, %s9
    %p138 = scmp.lt.s32.totalorder %s9, 3
    %p139 = pnand %p137, %p138
    %p140 = pneg %p139
    // Predicated region
    $region29: #{actor_forward.1} parent=5 // pred_check
      _
    $region30: #{actor_forward.1} parent=5 // pred_check_branch
      %142 = sbr.rel (%p139) target = $region32
    $region31: #{actor_forward.1} parent=5 // pred_region
      %s143 = ssub.s32 %s9, 1
      %s144 = smul.u32 32, %s14
      %p145 = scmp.lt.s32.totalorder %s144, 63
      %s146 = scalar_select %p145, %s144, 63
      %s147 = smul.addr %s146, 8
      %s148 = scalar_lea.vmem %s0, %s147
      %p149 = pneg %p35
      %p150 = pneg %p32
      %p151 = pneg %p56
      %p152 = pneg %p53
      %p153 = pneg %p77
      %p154 = pneg %p74
      %p155 = pneg %p103
      %p156 = pneg %p100
      %s157 = smul.u32 32, %s14
      %p158 = scmp.lt.s32.totalorder %s157, 63
      %s159 = scalar_select %p158, %s157, 63
      %s160 = smul.addr %s159, 8
      %s161 = scalar_lea.vmem %s3, %s160
      %s162 = smul.u32 32, %s14
      %p163 = scmp.lt.s32.totalorder %s162, 63
      %s164 = scalar_select %p163, %s162, 63
      %s165 = smul.addr %s164, 8
      %s166 = scalar_lea.vmem %s0, %s165
      %s167 = smul.u32 32, %s14
      %s168 = smul.u32 32, %s14
      %p169 = scmp.lt.s32.totalorder %s168, 63
      %s170 = scalar_select %p169, %s168, 63
      %s171 = smul.addr %s170, 8
      %s172 = scalar_lea.vmem %s3, %s171
      %s173 = smul.u32 32, %s14
      %v175 = vld [vmem:[%s166] sm:$0xff]
      %v176 = vld [vmem:[%s166 + $0x8] sm:$0xff]
      %v177 = vld [vmem:[%s166 + $0x10] sm:$0xff]
      %v178 = vld [vmem:[%s166 + $0x18] sm:$0xff]
      %v179 = vld [vmem:[%s166 + $0x20] sm:$0xff]
      %v180 = vld [vmem:[%s166 + $0x28] sm:$0xff]
      %v181 = vld [vmem:[%s166 + $0x30] sm:$0xff]
      %v182 = vld [vmem:[%s166 + $0x38] sm:$0xff]
      %v183 = vld [vmem:[%s166 + $0x40] sm:$0xff]
      %v184 = vld [vmem:[%s166 + $0x48] sm:$0xff]
      %v185 = vld [vmem:[%s166 + $0x50] sm:$0xff]
      %v186 = vld [vmem:[%s166 + $0x58] sm:$0xff]
      %v187 = vld [vmem:[%s166 + $0x60] sm:$0xff]
      %v188 = vld [vmem:[%s166 + $0x68] sm:$0xff]
      %v189 = vld [vmem:[%s166 + $0x70] sm:$0xff]
      %v190 = vld [vmem:[%s166 + $0x78] sm:$0xff]
      %v191 = vld [vmem:[%s166 + $0x80] sm:$0xff]
      %v192 = vld [vmem:[%s166 + $0x88] sm:$0xff]
      %v193 = vld [vmem:[%s166 + $0x90] sm:$0xff]
      %v194 = vld [vmem:[%s166 + $0x98] sm:$0xff]
      %v195 = vld [vmem:[%s166 + $0xa0] sm:$0xff]
      %v196 = vld [vmem:[%s166 + $0xa8] sm:$0xff]
      %v197 = vld [vmem:[%s166 + $0xb0] sm:$0xff]
      %v198 = vld [vmem:[%s166 + $0xb8] sm:$0xff]
      %v199 = vld [vmem:[%s166 + $0xc0] sm:$0xff]
      %v200 = vld [vmem:[%s166 + $0xc8] sm:$0xff]
      %v201 = vld [vmem:[%s166 + $0xd0] sm:$0xff]
      %v202 = vld [vmem:[%s166 + $0xd8] sm:$0xff]
      %v203 = vld [vmem:[%s166 + $0xe0] sm:$0xff]
      %v204 = vld [vmem:[%s166 + $0xe8] sm:$0xff]
      %v205 = vld [vmem:[%s166 + $0xf0] sm:$0xff]
      %v206 = vld [vmem:[%s166 + $0xf8] sm:$0xff]
      %v207 = vpack.c.bf16 %v176, %v175
      %v208 = vpack.c.bf16 %v178, %v177
      %v209 = vpack.c.bf16 %v180, %v179
      %v210 = vpack.c.bf16 %v182, %v181
      %v211 = vpack.c.bf16 %v184, %v183
      %v212 = vpack.c.bf16 %v186, %v185
      %v213 = vpack.c.bf16 %v188, %v187
      %v214 = vpack.c.bf16 %v190, %v189
      %v215 = vpack.c.bf16 %v192, %v191
      %v216 = vpack.c.bf16 %v194, %v193
      %v217 = vpack.c.bf16 %v196, %v195
      %v218 = vpack.c.bf16 %v198, %v197
      %v219 = vpack.c.bf16 %v200, %v199
      %v220 = vpack.c.bf16 %v202, %v201
      %v221 = vpack.c.bf16 %v204, %v203
      %v222 = vpack.c.bf16 %v206, %v205
      %v223 = vld [vmem:[%s1] sm:$0xf]
      %v224 = vld [vmem:[%s2] sm:$0x1]
      %v226 = vlaneseq
      %v227 = vshrl.u32 %v226, 7
      %v228 = vsub.s32 0, %v227
      %v229 = vrot.slane %v224, %v228
      %vm231 = vcmask 64512
      %v233 = vsel %vm231, %v207, 0
      %v236 = vsel %vm231, %v208, 0
      %v239 = vsel %vm231, %v209, 0
      %v242 = vsel %vm231, %v210, 0
      %v245 = vsel %vm231, %v211, 0
      %v248 = vsel %vm231, %v212, 0
      %v251 = vsel %vm231, %v213, 0
      %v254 = vsel %vm231, %v214, 0
      %v257 = vsel %vm231, %v215, 0
      %v260 = vsel %vm231, %v216, 0
      %v263 = vsel %vm231, %v217, 0
      %v266 = vsel %vm231, %v218, 0
      %v269 = vsel %vm231, %v219, 0
      %v272 = vsel %vm231, %v220, 0
      %v275 = vsel %vm231, %v221, 0
      %v278 = vsel %vm231, %v222, 0
      %vm280 = vcmask 1043456
      %v282 = vsel %vm280, %v223, 0
      %284 = vmatprep.subr.bf16.mxu0 0
      %285 = vmatpush1.bf16.msra.mxu0 %v282
      %286 = vmatprep.subr.bf16.mxu0 0
      %287 = vmatpush1.bf16.msra.mxu0 0
      %288 = vmatprep.subr.bf16.mxu0 0
      %289 = vmatpush1.bf16.msra.mxu0 0
      %290 = vmatprep.subr.bf16.mxu0 0
      %291 = vmatpush1.bf16.msra.mxu0 0
      %292 = vmatprep.subr.bf16.mxu0 0
      %293 = vmatpush1.bf16.msra.mxu0 0
      %294 = vmatprep.subr.bf16.mxu0 0
      %295 = vmatpush1.bf16.msra.mxu0 0
      %296 = vmatprep.subr.bf16.mxu0 0
      %297 = vmatpush1.bf16.msra.mxu0 0
      %298 = vmatprep.subr.bf16.mxu0 0
      %299 = vmatpush1.bf16.msra.mxu0 0
      %300 = vmatprep.subr.bf16.mxu0 0
      %301 = vmatpush1.bf16.msra.mxu0 0
      %302 = vmatprep.subr.bf16.mxu0 0
      %303 = vmatpush1.bf16.msra.mxu0 0
      %304 = vmatprep.subr.bf16.mxu0 0
      %305 = vmatpush1.bf16.msra.mxu0 0
      %306 = vmatprep.subr.bf16.mxu0 0
      %307 = vmatpush1.bf16.msra.mxu0 0
      %308 = vmatprep.subr.bf16.mxu0 0
      %309 = vmatpush1.bf16.msra.mxu0 0
      %310 = vmatprep.subr.bf16.mxu0 0
      %311 = vmatpush1.bf16.msra.mxu0 0
      %312 = vmatprep.subr.bf16.mxu0 0
      %313 = vmatpush1.bf16.msra.mxu0 0
      %314 = vmatprep.subr.bf16.mxu0 0
      %315 = vmatpush1.bf16.msra.mxu0 0
      %316 = vmatprep.mubr.bf16.mxu0 0
      %317 = vmatmul.mubr.bf16.gmra.mrb[0].mxu0 %v233
      %v318 = vpop.f32.mrb[0].mxu0
      %v319 = vadd.f32 %v229, %v318
      %v320 = vpop.f32.mrb[0].mxu0
      %v321 = vpop.f32.mrb[0].mxu0
      %v322 = vadd.f32 %v229, %v321
      %v323 = vpop.f32.mrb[0].mxu0
      %324 = vmatprep.mubr.bf16.mxu0 0
      %325 = vmatmul.mubr.bf16.gmra.mrb[0].mxu0 %v236
      %v326 = vpop.f32.mrb[0].mxu0
      %v327 = vadd.f32 %v229, %v326
      %v328 = vpop.f32.mrb[0].mxu0
      %v329 = vpop.f32.mrb[0].mxu0
      %v330 = vadd.f32 %v229, %v329
      %v331 = vpop.f32.mrb[0].mxu0
      %332 = vmatprep.mubr.bf16.mxu0 0
      %333 = vmatmul.mubr.bf16.gmra.mrb[0].mxu0 %v239
      %v334 = vpop.f32.mrb[0].mxu0
      %v335 = vadd.f32 %v229, %v334
      %v336 = vpop.f32.mrb[0].mxu0
      %v337 = vpop.f32.mrb[0].mxu0
      %v338 = vadd.f32 %v229, %v337
      %v339 = vpop.f32.mrb[0].mxu0
      %340 = vmatprep.mubr.bf16.mxu0 0
      %341 = vmatmul.mubr.bf16.gmra.mrb[0].mxu0 %v242
      %v342 = vpop.f32.mrb[0].mxu0
      %v343 = vadd.f32 %v229, %v342
      %v344 = vpop.f32.mrb[0].mxu0
      %v345 = vpop.f32.mrb[0].mxu0
      %v346 = vadd.f32 %v229, %v345
      %v347 = vpop.f32.mrb[0].mxu0
      %348 = vmatprep.mubr.bf16.mxu0 0
      %349 = vmatmul.mubr.bf16.gmra.mrb[0].mxu0 %v245
      %v350 = vpop.f32.mrb[0].mxu0
      %v351 = vadd.f32 %v229, %v350
      %v352 = vpop.f32.mrb[0].mxu0
      %v353 = vpop.f32.mrb[0].mxu0
      %v354 = vadd.f32 %v229, %v353
      %v355 = vpop.f32.mrb[0].mxu0
      %356 = vmatprep.mubr.bf16.mxu0 0
      %357 = vmatmul.mubr.bf16.gmra.mrb[0].mxu0 %v248
      %v358 = vpop.f32.mrb[0].mxu0
      %v359 = vadd.f32 %v229, %v358
      %v360 = vpop.f32.mrb[0].mxu0
      %v361 = vpop.f32.mrb[0].mxu0
      %v362 = vadd.f32 %v229, %v361
      %v363 = vpop.f32.mrb[0].mxu0
      %364 = vmatprep.mubr.bf16.mxu0 0
      %365 = vmatmul.mubr.bf16.gmra.mrb[0].mxu0 %v251
      %v366 = vpop.f32.mrb[0].mxu0
      %v367 = vadd.f32 %v229, %v366
      %v368 = vpop.f32.mrb[0].mxu0
      %v369 = vpop.f32.mrb[0].mxu0
      %v370 = vadd.f32 %v229, %v369
      %v371 = vpop.f32.mrb[0].mxu0
      %372 = vmatprep.mubr.bf16.mxu0 0
      %373 = vmatmul.mubr.bf16.gmra.mrb[0].mxu0 %v254
      %v374 = vpop.f32.mrb[0].mxu0
      %v375 = vadd.f32 %v229, %v374
      %v376 = vpop.f32.mrb[0].mxu0
      %v377 = vpop.f32.mrb[0].mxu0
      %v378 = vadd.f32 %v229, %v377
      %v379 = vpop.f32.mrb[0].mxu0
      %380 = vmatprep.mubr.bf16.mxu0 0
      %381 = vmatmul.mubr.bf16.gmra.mrb[0].mxu0 %v257
      %v382 = vpop.f32.mrb[0].mxu0
      %v383 = vadd.f32 %v229, %v382
      %v384 = vpop.f32.mrb[0].mxu0
      %v385 = vpop.f32.mrb[0].mxu0
      %v386 = vadd.f32 %v229, %v385
      %v387 = vpop.f32.mrb[0].mxu0
      %388 = vmatprep.mubr.bf16.mxu0 0
      %389 = vmatmul.mubr.bf16.gmra.mrb[0].mxu0 %v260
      %v390 = vpop.f32.mrb[0].mxu0
      %v391 = vadd.f32 %v229, %v390
      %v392 = vpop.f32.mrb[0].mxu0
      %v393 = vpop.f32.mrb[0].mxu0
      %v394 = vadd.f32 %v229, %v393
      %v395 = vpop.f32.mrb[0].mxu0
      %396 = vmatprep.mubr.bf16.mxu0 0
      %397 = vmatmul.mubr.bf16.gmra.mrb[0].mxu0 %v263
      %v398 = vpop.f32.mrb[0].mxu0
      %v399 = vadd.f32 %v229, %v398
      %v400 = vpop.f32.mrb[0].mxu0
      %v401 = vpop.f32.mrb[0].mxu0
      %v402 = vadd.f32 %v229, %v401
      %v403 = vpop.f32.mrb[0].mxu0
      %404 = vmatprep.mubr.bf16.mxu0 0
      %405 = vmatmul.mubr.bf16.gmra.mrb[0].mxu0 %v266
      %v406 = vpop.f32.mrb[0].mxu0
      %v407 = vadd.f32 %v229, %v406
      %v408 = vpop.f32.mrb[0].mxu0
      %v409 = vpop.f32.mrb[0].mxu0
      %v410 = vadd.f32 %v229, %v409
      %v411 = vpop.f32.mrb[0].mxu0
      %412 = vmatprep.mubr.bf16.mxu0 0
      %413 = vmatmul.mubr.bf16.gmra.mrb[0].mxu0 %v269
      %v414 = vpop.f32.mrb[0].mxu0
      %v415 = vadd.f32 %v229, %v414
      %v416 = vpop.f32.mrb[0].mxu0
      %v417 = vpop.f32.mrb[0].mxu0
      %v418 = vadd.f32 %v229, %v417
      %v419 = vpop.f32.mrb[0].mxu0
      %420 = vmatprep.mubr.bf16.mxu0 0
      %421 = vmatmul.mubr.bf16.gmra.mrb[0].mxu0 %v272
      %v422 = vpop.f32.mrb[0].mxu0
      %v423 = vadd.f32 %v229, %v422
      %v424 = vpop.f32.mrb[0].mxu0
      %v425 = vpop.f32.mrb[0].mxu0
      %v426 = vadd.f32 %v229, %v425
      %v427 = vpop.f32.mrb[0].mxu0
      %428 = vmatprep.mubr.bf16.mxu0 0
      %429 = vmatmul.mubr.bf16.gmra.mrb[0].mxu0 %v275
      %v430 = vpop.f32.mrb[0].mxu0
      %v431 = vadd.f32 %v229, %v430
      %v432 = vpop.f32.mrb[0].mxu0
      %v433 = vpop.f32.mrb[0].mxu0
      %v434 = vadd.f32 %v229, %v433
      %v435 = vpop.f32.mrb[0].mxu0
      %436 = vmatprep.mubr.bf16.mxu0 0
      %437 = vmatmul.mubr.bf16.gmra.mrb[0].mxu0 %v278
      %v438 = vpop.f32.mrb[0].mxu0
      %v439 = vadd.f32 %v229, %v438
      %v440 = vpop.f32.mrb[0].mxu0
      %v441 = vpop.f32.mrb[0].mxu0
      %v442 = vadd.f32 %v229, %v441
      %v443 = vpop.f32.mrb[0].mxu0
      %444 = vdwg.mxu0
      %v445 = vmax.f32 %v319, 0.0
      %v446 = vmax.f32 %v322, 0.0
      %v447 = vmax.f32 %v327, 0.0
      %v448 = vmax.f32 %v330, 0.0
      %v449 = vmax.f32 %v335, 0.0
      %v450 = vmax.f32 %v338, 0.0
      %v451 = vmax.f32 %v343, 0.0
      %v452 = vmax.f32 %v346, 0.0
      %v453 = vmax.f32 %v351, 0.0
      %v454 = vmax.f32 %v354, 0.0
      %v455 = vmax.f32 %v359, 0.0
      %v456 = vmax.f32 %v362, 0.0
      %v457 = vmax.f32 %v367, 0.0
      %v458 = vmax.f32 %v370, 0.0
      %v459 = vmax.f32 %v375, 0.0
      %v460 = vmax.f32 %v378, 0.0
      %v461 = vmax.f32 %v383, 0.0
      %v462 = vmax.f32 %v386, 0.0
      %v463 = vmax.f32 %v391, 0.0
      %v464 = vmax.f32 %v394, 0.0
      %v465 = vmax.f32 %v399, 0.0
      %v466 = vmax.f32 %v402, 0.0
      %v467 = vmax.f32 %v407, 0.0
      %v468 = vmax.f32 %v410, 0.0
      %v469 = vmax.f32 %v415, 0.0
      %v470 = vmax.f32 %v418, 0.0
      %v471 = vmax.f32 %v423, 0.0
      %v472 = vmax.f32 %v426, 0.0
      %v473 = vmax.f32 %v431, 0.0
      %v474 = vmax.f32 %v434, 0.0
      %v475 = vmax.f32 %v439, 0.0
      %v476 = vmax.f32 %v442, 0.0
      %v477 = vpack.c.bf16 %v446, %v445
      %v478 = vpack.c.bf16 %v448, %v447
      %v479 = vpack.c.bf16 %v450, %v449
      %v480 = vpack.c.bf16 %v452, %v451
      %v481 = vpack.c.bf16 %v454, %v453
      %v482 = vpack.c.bf16 %v456, %v455
      %v483 = vpack.c.bf16 %v458, %v457
      %v484 = vpack.c.bf16 %v460, %v459
      %v485 = vpack.c.bf16 %v462, %v461
      %v486 = vpack.c.bf16 %v464, %v463
      %v487 = vpack.c.bf16 %v466, %v465
      %v488 = vpack.c.bf16 %v468, %v467
      %v489 = vpack.c.bf16 %v470, %v469
      %v490 = vpack.c.bf16 %v472, %v471
      %v491 = vpack.c.bf16 %v474, %v473
      %v492 = vpack.c.bf16 %v476, %v475
      %s493 = scalar_lea.vmem %s1, 64
      %v494 = vld [vmem:[%s493] sm:$0xf]
      %v495 = vld [vmem:[%s493 + $0x4] sm:$0xf]
      %v496 = vld [vmem:[%s493 + $0x8] sm:$0xf]
      %v497 = vld [vmem:[%s493 + $0xc] sm:$0xf]
      %v498 = vld [vmem:[%s493 + $0x10] sm:$0xf]
      %v499 = vld [vmem:[%s493 + $0x14] sm:$0xf]
      %v500 = vld [vmem:[%s493 + $0x18] sm:$0xf]
      %v501 = vld [vmem:[%s493 + $0x1c] sm:$0xf]
      %v502 = vld [vmem:[%s493 + $0x20] sm:$0xf]
      %v503 = vld [vmem:[%s493 + $0x24] sm:$0xf]
      %v504 = vld [vmem:[%s493 + $0x28] sm:$0xf]
      %v505 = vld [vmem:[%s493 + $0x2c] sm:$0xf]
      %v506 = vld [vmem:[%s493 + $0x30] sm:$0xf]
      %v507 = vld [vmem:[%s493 + $0x34] sm:$0xf]
      %v508 = vld [vmem:[%s493 + $0x38] sm:$0xf]
      %v509 = vld [vmem:[%s493 + $0x3c] sm:$0xf]
      %s510 = scalar_lea.vmem %s2, 1
      %v511 = vld [vmem:[%s510] sm:$0x1]
      %v513 = vlaneseq
      %v514 = vshrl.u32 %v513, 7
      %v515 = vsub.s32 0, %v514
      %v516 = vrot.slane %v511, %v515
      %v534 = vunpack.c.l.b16 %v494
      %v535 = vunpack.c.l.b16 %v495
      %v536 = vunpack.c.l.b16 %v496
      %v537 = vunpack.c.l.b16 %v497
      %v538 = vunpack.c.l.b16 %v498
      %v539 = vunpack.c.l.b16 %v499
      %v540 = vunpack.c.l.b16 %v500
      %v541 = vunpack.c.l.b16 %v501
      %v542 = vunpack.c.l.b16 %v502
      %v543 = vunpack.c.l.b16 %v503
      %v544 = vunpack.c.l.b16 %v504
      %v545 = vunpack.c.l.b16 %v505
      %v546 = vunpack.c.l.b16 %v506
      %v547 = vunpack.c.l.b16 %v507
      %v548 = vunpack.c.l.b16 %v508
      %v549 = vunpack.c.l.b16 %v509
      %v550 = vpack.c.b16 %v535, %v534
      %v551 = vpack.c.b16 %v537, %v536
      %v552 = vpack.c.b16 %v539, %v538
      %v553 = vpack.c.b16 %v541, %v540
      %v554 = vpack.c.b16 %v543, %v542
      %v555 = vpack.c.b16 %v545, %v544
      %v556 = vpack.c.b16 %v547, %v546
      %v557 = vpack.c.b16 %v549, %v548
      %566 = vmatprep.subr.bf16.mxu0 0
      %567 = vmatpush1.bf16.msra.mxu0 %v550
      %568 = vmatprep.subr.bf16.mxu0 0
      %569 = vmatpush1.bf16.msra.mxu0 %v551
      %570 = vmatprep.subr.bf16.mxu0 0
      %571 = vmatpush1.bf16.msra.mxu0 %v552
      %572 = vmatprep.subr.bf16.mxu0 0
      %573 = vmatpush1.bf16.msra.mxu0 %v553
      %574 = vmatprep.subr.bf16.mxu0 0
      %575 = vmatpush1.bf16.msra.mxu0 %v554
      %576 = vmatprep.subr.bf16.mxu0 0
      %577 = vmatpush1.bf16.msra.mxu0 %v555
      %578 = vmatprep.subr.bf16.mxu0 0
      %579 = vmatpush1.bf16.msra.mxu0 %v556
      %580 = vmatprep.subr.bf16.mxu0 0
      %581 = vmatpush1.bf16.msra.mxu0 %v557
      %582 = vmatprep.subr.bf16.mxu0 0
      %583 = vmatpush1.bf16.msra.mxu0 0
      %584 = vmatprep.subr.bf16.mxu0 0
      %585 = vmatpush1.bf16.msra.mxu0 0
      %586 = vmatprep.subr.bf16.mxu0 0
      %587 = vmatpush1.bf16.msra.mxu0 0
      %588 = vmatprep.subr.bf16.mxu0 0
      %589 = vmatpush1.bf16.msra.mxu0 0
      %590 = vmatprep.subr.bf16.mxu0 0
      %591 = vmatpush1.bf16.msra.mxu0 0
      %592 = vmatprep.subr.bf16.mxu0 0
      %593 = vmatpush1.bf16.msra.mxu0 0
      %594 = vmatprep.subr.bf16.mxu0 0
      %595 = vmatpush1.bf16.msra.mxu0 0
      %596 = vmatprep.subr.bf16.mxu0 0
      %597 = vmatpush1.bf16.msra.mxu0 0
      %598 = vmatprep.mubr.bf16.mxu0 0
      %599 = vmatmul.mubr.bf16.gmra.mrb[0].mxu0 %v477
      %v600 = vpop.f32.mrb[0].mxu0
      %v601 = vadd.f32 %v516, %v600
      %v602 = vpop.f32.mrb[0].mxu0
      %v603 = vpop.f32.mrb[0].mxu0
      %v604 = vadd.f32 %v516, %v603
      %v605 = vpop.f32.mrb[0].mxu0
      %606 = vmatprep.mubr.bf16.mxu0 0
      %607 = vmatmul.mubr.bf16.gmra.mrb[0].mxu0 %v478
      %v608 = vpop.f32.mrb[0].mxu0
      %v609 = vadd.f32 %v516, %v608
      %v610 = vpop.f32.mrb[0].mxu0
      %v611 = vpop.f32.mrb[0].mxu0
      %v612 = vadd.f32 %v516, %v611
      %v613 = vpop.f32.mrb[0].mxu0
      %614 = vmatprep.mubr.bf16.mxu0 0
      %615 = vmatmul.mubr.bf16.gmra.mrb[0].mxu0 %v479
      %v616 = vpop.f32.mrb[0].mxu0
      %v617 = vadd.f32 %v516, %v616
      %v618 = vpop.f32.mrb[0].mxu0
      %v619 = vpop.f32.mrb[0].mxu0
      %v620 = vadd.f32 %v516, %v619
      %v621 = vpop.f32.mrb[0].mxu0
      %622 = vmatprep.mubr.bf16.mxu0 0
      %623 = vmatmul.mubr.bf16.gmra.mrb[0].mxu0 %v480
      %v624 = vpop.f32.mrb[0].mxu0
      %v625 = vadd.f32 %v516, %v624
      %v626 = vpop.f32.mrb[0].mxu0
      %v627 = vpop.f32.mrb[0].mxu0
      %v628 = vadd.f32 %v516, %v627
      %v629 = vpop.f32.mrb[0].mxu0
      %630 = vmatprep.mubr.bf16.mxu0 0
      %631 = vmatmul.mubr.bf16.gmra.mrb[0].mxu0 %v481
      %v632 = vpop.f32.mrb[0].mxu0
      %v633 = vadd.f32 %v516, %v632
      %v634 = vpop.f32.mrb[0].mxu0
      %v635 = vpop.f32.mrb[0].mxu0
      %v636 = vadd.f32 %v516, %v635
      %v637 = vpop.f32.mrb[0].mxu0
      %638 = vmatprep.mubr.bf16.mxu0 0
      %639 = vmatmul.mubr.bf16.gmra.mrb[0].mxu0 %v482
      %v640 = vpop.f32.mrb[0].mxu0
      %v641 = vadd.f32 %v516, %v640
      %v642 = vpop.f32.mrb[0].mxu0
      %v643 = vpop.f32.mrb[0].mxu0
      %v644 = vadd.f32 %v516, %v643
      %v645 = vpop.f32.mrb[0].mxu0
      %646 = vmatprep.mubr.bf16.mxu0 0
      %647 = vmatmul.mubr.bf16.gmra.mrb[0].mxu0 %v483
      %v648 = vpop.f32.mrb[0].mxu0
      %v649 = vadd.f32 %v516, %v648
      %v650 = vpop.f32.mrb[0].mxu0
      %v651 = vpop.f32.mrb[0].mxu0
      %v652 = vadd.f32 %v516, %v651
      %v653 = vpop.f32.mrb[0].mxu0
      %654 = vmatprep.mubr.bf16.mxu0 0
      %655 = vmatmul.mubr.bf16.gmra.mrb[0].mxu0 %v484
      %v656 = vpop.f32.mrb[0].mxu0
      %v657 = vadd.f32 %v516, %v656
      %v658 = vpop.f32.mrb[0].mxu0
      %v659 = vpop.f32.mrb[0].mxu0
      %v660 = vadd.f32 %v516, %v659
      %v661 = vpop.f32.mrb[0].mxu0
      %662 = vmatprep.mubr.bf16.mxu0 0
      %663 = vmatmul.mubr.bf16.gmra.mrb[0].mxu0 %v485
      %v664 = vpop.f32.mrb[0].mxu0
      %v665 = vadd.f32 %v516, %v664
      %v666 = vpop.f32.mrb[0].mxu0
      %v667 = vpop.f32.mrb[0].mxu0
      %v668 = vadd.f32 %v516, %v667
      %v669 = vpop.f32.mrb[0].mxu0
      %670 = vmatprep.mubr.bf16.mxu0 0
      %671 = vmatmul.mubr.bf16.gmra.mrb[0].mxu0 %v486
      %v672 = vpop.f32.mrb[0].mxu0
      %v673 = vadd.f32 %v516, %v672
      %v674 = vpop.f32.mrb[0].mxu0
      %v675 = vpop.f32.mrb[0].mxu0
      %v676 = vadd.f32 %v516, %v675
      %v677 = vpop.f32.mrb[0].mxu0
      %678 = vmatprep.mubr.bf16.mxu0 0
      %679 = vmatmul.mubr.bf16.gmra.mrb[0].mxu0 %v487
      %v680 = vpop.f32.mrb[0].mxu0
      %v681 = vadd.f32 %v516, %v680
      %v682 = vpop.f32.mrb[0].mxu0
      %v683 = vpop.f32.mrb[0].mxu0
      %v684 = vadd.f32 %v516, %v683
      %v685 = vpop.f32.mrb[0].mxu0
      %686 = vmatprep.mubr.bf16.mxu0 0
      %687 = vmatmul.mubr.bf16.gmra.mrb[0].mxu0 %v488
      %v688 = vpop.f32.mrb[0].mxu0
      %v689 = vadd.f32 %v516, %v688
      %v690 = vpop.f32.mrb[0].mxu0
      %v691 = vpop.f32.mrb[0].mxu0
      %v692 = vadd.f32 %v516, %v691
      %v693 = vpop.f32.mrb[0].mxu0
      %694 = vmatprep.mubr.bf16.mxu0 0
      %695 = vmatmul.mubr.bf16.gmra.mrb[0].mxu0 %v489
      %v696 = vpop.f32.mrb[0].mxu0
      %v697 = vadd.f32 %v516, %v696
      %v698 = vpop.f32.mrb[0].mxu0
      %v699 = vpop.f32.mrb[0].mxu0
      %v700 = vadd.f32 %v516, %v699
      %v701 = vpop.f32.mrb[0].mxu0
      %702 = vmatprep.mubr.bf16.mxu0 0
      %703 = vmatmul.mubr.bf16.gmra.mrb[0].mxu0 %v490
      %v704 = vpop.f32.mrb[0].mxu0
      %v705 = vadd.f32 %v516, %v704
      %v706 = vpop.f32.mrb[0].mxu0
      %v707 = vpop.f32.mrb[0].mxu0
      %v708 = vadd.f32 %v516, %v707
      %v709 = vpop.f32.mrb[0].mxu0
      %710 = vmatprep.mubr.bf16.mxu0 0
      %711 = vmatmul.mubr.bf16.gmra.mrb[0].mxu0 %v491
      %v712 = vpop.f32.mrb[0].mxu0
      %v713 = vadd.f32 %v516, %v712
      %v714 = vpop.f32.mrb[0].mxu0
      %v715 = vpop.f32.mrb[0].mxu0
      %v716 = vadd.f32 %v516, %v715
      %v717 = vpop.f32.mrb[0].mxu0
      %718 = vmatprep.mubr.bf16.mxu0 0
      %719 = vmatmul.mubr.bf16.gmra.mrb[0].mxu0 %v492
      %v720 = vpop.f32.mrb[0].mxu0
      %v721 = vadd.f32 %v516, %v720
      %v722 = vpop.f32.mrb[0].mxu0
      %v723 = vpop.f32.mrb[0].mxu0
      %v724 = vadd.f32 %v516, %v723
      %v725 = vpop.f32.mrb[0].mxu0
      %726 = vdwg.mxu0
      %v727 = vmax.f32 %v601, 0.0
      %v728 = vmax.f32 %v604, 0.0
      %v729 = vmax.f32 %v609, 0.0
      %v730 = vmax.f32 %v612, 0.0
      %v731 = vmax.f32 %v617, 0.0
      %v732 = vmax.f32 %v620, 0.0
      %v733 = vmax.f32 %v625, 0.0
      %v734 = vmax.f32 %v628, 0.0
      %v735 = vmax.f32 %v633, 0.0
      %v736 = vmax.f32 %v636, 0.0
      %v737 = vmax.f32 %v641, 0.0
      %v738 = vmax.f32 %v644, 0.0
      %v739 = vmax.f32 %v649, 0.0
      %v740 = vmax.f32 %v652, 0.0
      %v741 = vmax.f32 %v657, 0.0
      %v742 = vmax.f32 %v660, 0.0
      %v743 = vmax.f32 %v665, 0.0
      %v744 = vmax.f32 %v668, 0.0
      %v745 = vmax.f32 %v673, 0.0
      %v746 = vmax.f32 %v676, 0.0
      %v747 = vmax.f32 %v681, 0.0
      %v748 = vmax.f32 %v684, 0.0
      %v749 = vmax.f32 %v689, 0.0
      %v750 = vmax.f32 %v692, 0.0
      %v751 = vmax.f32 %v697, 0.0
      %v752 = vmax.f32 %v700, 0.0
      %v753 = vmax.f32 %v705, 0.0
      %v754 = vmax.f32 %v708, 0.0
      %v755 = vmax.f32 %v713, 0.0
      %v756 = vmax.f32 %v716, 0.0
      %v757 = vmax.f32 %v721, 0.0
      %v758 = vmax.f32 %v724, 0.0
      %v759 = vpack.c.bf16 %v728, %v727
      %v760 = vpack.c.bf16 %v730, %v729
      %v761 = vpack.c.bf16 %v732, %v731
      %v762 = vpack.c.bf16 %v734, %v733
      %v763 = vpack.c.bf16 %v736, %v735
      %v764 = vpack.c.bf16 %v738, %v737
      %v765 = vpack.c.bf16 %v740, %v739
      %v766 = vpack.c.bf16 %v742, %v741
      %v767 = vpack.c.bf16 %v744, %v743
      %v768 = vpack.c.bf16 %v746, %v745
      %v769 = vpack.c.bf16 %v748, %v747
      %v770 = vpack.c.bf16 %v750, %v749
      %v771 = vpack.c.bf16 %v752, %v751
      %v772 = vpack.c.bf16 %v754, %v753
      %v773 = vpack.c.bf16 %v756, %v755
      %v774 = vpack.c.bf16 %v758, %v757
      %s775 = scalar_lea.vmem %s1, 128
      %v776 = vld [vmem:[%s775] sm:$0xf]
      %v777 = vld [vmem:[%s775 + $0x4] sm:$0xf]
      %v778 = vld [vmem:[%s775 + $0x8] sm:$0xf]
      %v779 = vld [vmem:[%s775 + $0xc] sm:$0xf]
      %v780 = vld [vmem:[%s775 + $0x10] sm:$0xf]
      %v781 = vld [vmem:[%s775 + $0x14] sm:$0xf]
      %v782 = vld [vmem:[%s775 + $0x18] sm:$0xf]
      %v783 = vld [vmem:[%s775 + $0x1c] sm:$0xf]
      %v784 = vld [vmem:[%s775 + $0x20] sm:$0xf]
      %v785 = vld [vmem:[%s775 + $0x24] sm:$0xf]
      %v786 = vld [vmem:[%s775 + $0x28] sm:$0xf]
      %v787 = vld [vmem:[%s775 + $0x2c] sm:$0xf]
      %v788 = vld [vmem:[%s775 + $0x30] sm:$0xf]
      %v789 = vld [vmem:[%s775 + $0x34] sm:$0xf]
      %v790 = vld [vmem:[%s775 + $0x38] sm:$0xf]
      %v791 = vld [vmem:[%s775 + $0x3c] sm:$0xf]
      %s792 = scalar_lea.vmem %s2, 2
      %v793 = vld [vmem:[%s792] sm:$0x1]
      %v795 = vlaneseq
      %v796 = vshrl.u32 %v795, 7
      %v797 = vsub.s32 0, %v796
      %v798 = vrot.slane %v793, %v797
      %v816 = vunpack.c.l.b16 %v776
      %v817 = vunpack.c.l.b16 %v777
      %v818 = vunpack.c.l.b16 %v778
      %v819 = vunpack.c.l.b16 %v779
      %v820 = vunpack.c.l.b16 %v780
      %v821 = vunpack.c.l.b16 %v781
      %v822 = vunpack.c.l.b16 %v782
      %v823 = vunpack.c.l.b16 %v783
      %v824 = vunpack.c.l.b16 %v784
      %v825 = vunpack.c.l.b16 %v785
      %v826 = vunpack.c.l.b16 %v786
      %v827 = vunpack.c.l.b16 %v787
      %v828 = vunpack.c.l.b16 %v788
      %v829 = vunpack.c.l.b16 %v789
      %v830 = vunpack.c.l.b16 %v790
      %v831 = vunpack.c.l.b16 %v791
      %v832 = vpack.c.b16 %v817, %v816
      %v833 = vpack.c.b16 %v819, %v818
      %v834 = vpack.c.b16 %v821, %v820
      %v835 = vpack.c.b16 %v823, %v822
      %v836 = vpack.c.b16 %v825, %v824
      %v837 = vpack.c.b16 %v827, %v826
      %v838 = vpack.c.b16 %v829, %v828
      %v839 = vpack.c.b16 %v831, %v830
      %848 = vmatprep.subr.bf16.mxu0 0
      %849 = vmatpush1.bf16.msra.mxu0 %v832
      %850 = vmatprep.subr.bf16.mxu0 0
      %851 = vmatpush1.bf16.msra.mxu0 %v833
      %852 = vmatprep.subr.bf16.mxu0 0
      %853 = vmatpush1.bf16.msra.mxu0 %v834
      %854 = vmatprep.subr.bf16.mxu0 0
      %855 = vmatpush1.bf16.msra.mxu0 %v835
      %856 = vmatprep.subr.bf16.mxu0 0
      %857 = vmatpush1.bf16.msra.mxu0 %v836
      %858 = vmatprep.subr.bf16.mxu0 0
      %859 = vmatpush1.bf16.msra.mxu0 %v837
      %860 = vmatprep.subr.bf16.mxu0 0
      %861 = vmatpush1.bf16.msra.mxu0 %v838
      %862 = vmatprep.subr.bf16.mxu0 0
      %863 = vmatpush1.bf16.msra.mxu0 %v839
      %864 = vmatprep.subr.bf16.mxu0 0
      %865 = vmatpush1.bf16.msra.mxu0 0
      %866 = vmatprep.subr.bf16.mxu0 0
      %867 = vmatpush1.bf16.msra.mxu0 0
      %868 = vmatprep.subr.bf16.mxu0 0
      %869 = vmatpush1.bf16.msra.mxu0 0
      %870 = vmatprep.subr.bf16.mxu0 0
      %871 = vmatpush1.bf16.msra.mxu0 0
      %872 = vmatprep.subr.bf16.mxu0 0
      %873 = vmatpush1.bf16.msra.mxu0 0
      %874 = vmatprep.subr.bf16.mxu0 0
      %875 = vmatpush1.bf16.msra.mxu0 0
      %876 = vmatprep.subr.bf16.mxu0 0
      %877 = vmatpush1.bf16.msra.mxu0 0
      %878 = vmatprep.subr.bf16.mxu0 0
      %879 = vmatpush1.bf16.msra.mxu0 0
      %880 = vmatprep.mubr.bf16.mxu0 0
      %881 = vmatmul.mubr.bf16.gmra.mrb[0].mxu0 %v759
      %v882 = vpop.f32.mrb[0].mxu0
      %v883 = vadd.f32 %v798, %v882
      %v884 = vpop.f32.mrb[0].mxu0
      %v885 = vpop.f32.mrb[0].mxu0
      %v886 = vadd.f32 %v798, %v885
      %v887 = vpop.f32.mrb[0].mxu0
      %888 = vmatprep.mubr.bf16.mxu0 0
      %889 = vmatmul.mubr.bf16.gmra.mrb[0].mxu0 %v760
      %v890 = vpop.f32.mrb[0].mxu0
      %v891 = vadd.f32 %v798, %v890
      %v892 = vpop.f32.mrb[0].mxu0
      %v893 = vpop.f32.mrb[0].mxu0
      %v894 = vadd.f32 %v798, %v893
      %v895 = vpop.f32.mrb[0].mxu0
      %896 = vmatprep.mubr.bf16.mxu0 0
      %897 = vmatmul.mubr.bf16.gmra.mrb[0].mxu0 %v761
      %v898 = vpop.f32.mrb[0].mxu0
      %v899 = vadd.f32 %v798, %v898
      %v900 = vpop.f32.mrb[0].mxu0
      %v901 = vpop.f32.mrb[0].mxu0
      %v902 = vadd.f32 %v798, %v901
      %v903 = vpop.f32.mrb[0].mxu0
      %904 = vmatprep.mubr.bf16.mxu0 0
      %905 = vmatmul.mubr.bf16.gmra.mrb[0].mxu0 %v762
      %v906 = vpop.f32.mrb[0].mxu0
      %v907 = vadd.f32 %v798, %v906
      %v908 = vpop.f32.mrb[0].mxu0
      %v909 = vpop.f32.mrb[0].mxu0
      %v910 = vadd.f32 %v798, %v909
      %v911 = vpop.f32.mrb[0].mxu0
      %912 = vmatprep.mubr.bf16.mxu0 0
      %913 = vmatmul.mubr.bf16.gmra.mrb[0].mxu0 %v763
      %v914 = vpop.f32.mrb[0].mxu0
      %v915 = vadd.f32 %v798, %v914
      %v916 = vpop.f32.mrb[0].mxu0
      %v917 = vpop.f32.mrb[0].mxu0
      %v918 = vadd.f32 %v798, %v917
      %v919 = vpop.f32.mrb[0].mxu0
      %920 = vmatprep.mubr.bf16.mxu0 0
      %921 = vmatmul.mubr.bf16.gmra.mrb[0].mxu0 %v764
      %v922 = vpop.f32.mrb[0].mxu0
      %v923 = vadd.f32 %v798, %v922
      %v924 = vpop.f32.mrb[0].mxu0
      %v925 = vpop.f32.mrb[0].mxu0
      %v926 = vadd.f32 %v798, %v925
      %v927 = vpop.f32.mrb[0].mxu0
      %928 = vmatprep.mubr.bf16.mxu0 0
      %929 = vmatmul.mubr.bf16.gmra.mrb[0].mxu0 %v765
      %v930 = vpop.f32.mrb[0].mxu0
      %v931 = vadd.f32 %v798, %v930
      %v932 = vpop.f32.mrb[0].mxu0
      %v933 = vpop.f32.mrb[0].mxu0
      %v934 = vadd.f32 %v798, %v933
      %v935 = vpop.f32.mrb[0].mxu0
      %936 = vmatprep.mubr.bf16.mxu0 0
      %937 = vmatmul.mubr.bf16.gmra.mrb[0].mxu0 %v766
      %v938 = vpop.f32.mrb[0].mxu0
      %v939 = vadd.f32 %v798, %v938
      %v940 = vpop.f32.mrb[0].mxu0
      %v941 = vpop.f32.mrb[0].mxu0
      %v942 = vadd.f32 %v798, %v941
      %v943 = vpop.f32.mrb[0].mxu0
      %944 = vmatprep.mubr.bf16.mxu0 0
      %945 = vmatmul.mubr.bf16.gmra.mrb[0].mxu0 %v767
      %v946 = vpop.f32.mrb[0].mxu0
      %v947 = vadd.f32 %v798, %v946
      %v948 = vpop.f32.mrb[0].mxu0
      %v949 = vpop.f32.mrb[0].mxu0
      %v950 = vadd.f32 %v798, %v949
      %v951 = vpop.f32.mrb[0].mxu0
      %952 = vmatprep.mubr.bf16.mxu0 0
      %953 = vmatmul.mubr.bf16.gmra.mrb[0].mxu0 %v768
      %v954 = vpop.f32.mrb[0].mxu0
      %v955 = vadd.f32 %v798, %v954
      %v956 = vpop.f32.mrb[0].mxu0
      %v957 = vpop.f32.mrb[0].mxu0
      %v958 = vadd.f32 %v798, %v957
      %v959 = vpop.f32.mrb[0].mxu0
      %960 = vmatprep.mubr.bf16.mxu0 0
      %961 = vmatmul.mubr.bf16.gmra.mrb[0].mxu0 %v769
      %v962 = vpop.f32.mrb[0].mxu0
      %v963 = vadd.f32 %v798, %v962
      %v964 = vpop.f32.mrb[0].mxu0
      %v965 = vpop.f32.mrb[0].mxu0
      %v966 = vadd.f32 %v798, %v965
      %v967 = vpop.f32.mrb[0].mxu0
      %968 = vmatprep.mubr.bf16.mxu0 0
      %969 = vmatmul.mubr.bf16.gmra.mrb[0].mxu0 %v770
      %v970 = vpop.f32.mrb[0].mxu0
      %v971 = vadd.f32 %v798, %v970
      %v972 = vpop.f32.mrb[0].mxu0
      %v973 = vpop.f32.mrb[0].mxu0
      %v974 = vadd.f32 %v798, %v973
      %v975 = vpop.f32.mrb[0].mxu0
      %976 = vmatprep.mubr.bf16.mxu0 0
      %977 = vmatmul.mubr.bf16.gmra.mrb[0].mxu0 %v771
      %v978 = vpop.f32.mrb[0].mxu0
      %v979 = vadd.f32 %v798, %v978
      %v980 = vpop.f32.mrb[0].mxu0
      %v981 = vpop.f32.mrb[0].mxu0
      %v982 = vadd.f32 %v798, %v981
      %v983 = vpop.f32.mrb[0].mxu0
      %984 = vmatprep.mubr.bf16.mxu0 0
      %985 = vmatmul.mubr.bf16.gmra.mrb[0].mxu0 %v772
      %v986 = vpop.f32.mrb[0].mxu0
      %v987 = vadd.f32 %v798, %v986
      %v988 = vpop.f32.mrb[0].mxu0
      %v989 = vpop.f32.mrb[0].mxu0
      %v990 = vadd.f32 %v798, %v989
      %v991 = vpop.f32.mrb[0].mxu0
      %992 = vmatprep.mubr.bf16.mxu0 0
      %993 = vmatmul.mubr.bf16.gmra.mrb[0].mxu0 %v773
      %v994 = vpop.f32.mrb[0].mxu0
      %v995 = vadd.f32 %v798, %v994
      %v996 = vpop.f32.mrb[0].mxu0
      %v997 = vpop.f32.mrb[0].mxu0
      %v998 = vadd.f32 %v798, %v997
      %v999 = vpop.f32.mrb[0].mxu0
      %1000 = vmatprep.mubr.bf16.mxu0 0
      %1001 = vmatmul.mubr.bf16.gmra.mrb[0].mxu0 %v774
      %v1002 = vpop.f32.mrb[0].mxu0
      %v1003 = vadd.f32 %v798, %v1002
      %v1004 = vpop.f32.mrb[0].mxu0
      %v1005 = vpop.f32.mrb[0].mxu0
      %v1006 = vadd.f32 %v798, %v1005
      %v1007 = vpop.f32.mrb[0].mxu0
      %1008 = vdwg.mxu0
      %v1009 = vmax.f32 %v883, 0.0
      %v1010 = vmax.f32 %v886, 0.0
      %v1011 = vmax.f32 %v891, 0.0
      %v1012 = vmax.f32 %v894, 0.0
      %v1013 = vmax.f32 %v899, 0.0
      %v1014 = vmax.f32 %v902, 0.0
      %v1015 = vmax.f32 %v907, 0.0
      %v1016 = vmax.f32 %v910, 0.0
      %v1017 = vmax.f32 %v915, 0.0
      %v1018 = vmax.f32 %v918, 0.0
      %v1019 = vmax.f32 %v923, 0.0
      %v1020 = vmax.f32 %v926, 0.0
      %v1021 = vmax.f32 %v931, 0.0
      %v1022 = vmax.f32 %v934, 0.0
      %v1023 = vmax.f32 %v939, 0.0
      %v1024 = vmax.f32 %v942, 0.0
      %v1025 = vmax.f32 %v947, 0.0
      %v1026 = vmax.f32 %v950, 0.0
      %v1027 = vmax.f32 %v955, 0.0
      %v1028 = vmax.f32 %v958, 0.0
      %v1029 = vmax.f32 %v963, 0.0
      %v1030 = vmax.f32 %v966, 0.0
      %v1031 = vmax.f32 %v971, 0.0
      %v1032 = vmax.f32 %v974, 0.0
      %v1033 = vmax.f32 %v979, 0.0
      %v1034 = vmax.f32 %v982, 0.0
      %v1035 = vmax.f32 %v987, 0.0
      %v1036 = vmax.f32 %v990, 0.0
      %v1037 = vmax.f32 %v995, 0.0
      %v1038 = vmax.f32 %v998, 0.0
      %v1039 = vmax.f32 %v1003, 0.0
      %v1040 = vmax.f32 %v1006, 0.0
      %v1041 = vpack.c.bf16 %v1010, %v1009
      %v1042 = vpack.c.bf16 %v1012, %v1011
      %v1043 = vpack.c.bf16 %v1014, %v1013
      %v1044 = vpack.c.bf16 %v1016, %v1015
      %v1045 = vpack.c.bf16 %v1018, %v1017
      %v1046 = vpack.c.bf16 %v1020, %v1019
      %v1047 = vpack.c.bf16 %v1022, %v1021
      %v1048 = vpack.c.bf16 %v1024, %v1023
      %v1049 = vpack.c.bf16 %v1026, %v1025
      %v1050 = vpack.c.bf16 %v1028, %v1027
      %v1051 = vpack.c.bf16 %v1030, %v1029
      %v1052 = vpack.c.bf16 %v1032, %v1031
      %v1053 = vpack.c.bf16 %v1034, %v1033
      %v1054 = vpack.c.bf16 %v1036, %v1035
      %v1055 = vpack.c.bf16 %v1038, %v1037
      %v1056 = vpack.c.bf16 %v1040, %v1039
      %s1057 = scalar_lea.vmem %s1, 192
      %v1058 = vld [vmem:[%s1057] sm:$0xf]
      %v1059 = vld [vmem:[%s1057 + $0x4] sm:$0xf]
      %v1060 = vld [vmem:[%s1057 + $0x8] sm:$0xf]
      %v1061 = vld [vmem:[%s1057 + $0xc] sm:$0xf]
      %v1062 = vld [vmem:[%s1057 + $0x10] sm:$0xf]
      %v1063 = vld [vmem:[%s1057 + $0x14] sm:$0xf]
      %v1064 = vld [vmem:[%s1057 + $0x18] sm:$0xf]
      %v1065 = vld [vmem:[%s1057 + $0x1c] sm:$0xf]
      %v1066 = vld [vmem:[%s1057 + $0x20] sm:$0xf]
      %v1067 = vld [vmem:[%s1057 + $0x24] sm:$0xf]
      %v1068 = vld [vmem:[%s1057 + $0x28] sm:$0xf]
      %v1069 = vld [vmem:[%s1057 + $0x2c] sm:$0xf]
      %v1070 = vld [vmem:[%s1057 + $0x30] sm:$0xf]
      %v1071 = vld [vmem:[%s1057 + $0x34] sm:$0xf]
      %v1072 = vld [vmem:[%s1057 + $0x38] sm:$0xf]
      %v1073 = vld [vmem:[%s1057 + $0x3c] sm:$0xf]
      %s1074 = scalar_lea.vmem %s2, 3
      %v1075 = vld [vmem:[%s1074] sm:$0x1]
      %v1077 = vlaneseq
      %v1078 = vshrl.u32 %v1077, 7
      %v1079 = vsub.s32 0, %v1078
      %v1080 = vrot.slane %v1075, %v1079
      %v1098 = vunpack.c.l.b16 %v1058
      %v1099 = vunpack.c.l.b16 %v1059
      %v1100 = vunpack.c.l.b16 %v1060
      %v1101 = vunpack.c.l.b16 %v1061
      %v1102 = vunpack.c.l.b16 %v1062
      %v1103 = vunpack.c.l.b16 %v1063
      %v1104 = vunpack.c.l.b16 %v1064
      %v1105 = vunpack.c.l.b16 %v1065
      %v1106 = vunpack.c.l.b16 %v1066
      %v1107 = vunpack.c.l.b16 %v1067
      %v1108 = vunpack.c.l.b16 %v1068
      %v1109 = vunpack.c.l.b16 %v1069
      %v1110 = vunpack.c.l.b16 %v1070
      %v1111 = vunpack.c.l.b16 %v1071
      %v1112 = vunpack.c.l.b16 %v1072
      %v1113 = vunpack.c.l.b16 %v1073
      %v1114 = vpack.c.b16 %v1099, %v1098
      %v1115 = vpack.c.b16 %v1101, %v1100
      %v1116 = vpack.c.b16 %v1103, %v1102
      %v1117 = vpack.c.b16 %v1105, %v1104
      %v1118 = vpack.c.b16 %v1107, %v1106
      %v1119 = vpack.c.b16 %v1109, %v1108
      %v1120 = vpack.c.b16 %v1111, %v1110
      %v1121 = vpack.c.b16 %v1113, %v1112
      %1130 = vmatprep.subr.bf16.mxu0 0
      %1131 = vmatpush1.bf16.msra.mxu0 %v1114
      %1132 = vmatprep.subr.bf16.mxu0 0
      %1133 = vmatpush1.bf16.msra.mxu0 %v1115
      %1134 = vmatprep.subr.bf16.mxu0 0
      %1135 = vmatpush1.bf16.msra.mxu0 %v1116
      %1136 = vmatprep.subr.bf16.mxu0 0
      %1137 = vmatpush1.bf16.msra.mxu0 %v1117
      %1138 = vmatprep.subr.bf16.mxu0 0
      %1139 = vmatpush1.bf16.msra.mxu0 %v1118
      %1140 = vmatprep.subr.bf16.mxu0 0
      %1141 = vmatpush1.bf16.msra.mxu0 %v1119
      %1142 = vmatprep.subr.bf16.mxu0 0
      %1143 = vmatpush1.bf16.msra.mxu0 %v1120
      %1144 = vmatprep.subr.bf16.mxu0 0
      %1145 = vmatpush1.bf16.msra.mxu0 %v1121
      %1146 = vmatprep.subr.bf16.mxu0 0
      %1147 = vmatpush1.bf16.msra.mxu0 0
      %1148 = vmatprep.subr.bf16.mxu0 0
      %1149 = vmatpush1.bf16.msra.mxu0 0
      %1150 = vmatprep.subr.bf16.mxu0 0
      %1151 = vmatpush1.bf16.msra.mxu0 0
      %1152 = vmatprep.subr.bf16.mxu0 0
      %1153 = vmatpush1.bf16.msra.mxu0 0
      %1154 = vmatprep.subr.bf16.mxu0 0
      %1155 = vmatpush1.bf16.msra.mxu0 0
      %1156 = vmatprep.subr.bf16.mxu0 0
      %1157 = vmatpush1.bf16.msra.mxu0 0
      %1158 = vmatprep.subr.bf16.mxu0 0
      %1159 = vmatpush1.bf16.msra.mxu0 0
      %1160 = vmatprep.subr.bf16.mxu0 0
      %1161 = vmatpush1.bf16.msra.mxu0 0
      %1162 = vmatprep.mubr.bf16.mxu0 0
      %1163 = vmatmul.mubr.bf16.gmra.mrb[0].mxu0 %v1041
      %v1164 = vpop.f32.mrb[0].mxu0
      %v1165 = vadd.f32 %v1080, %v1164
      %v1166 = vpop.f32.mrb[0].mxu0
      %v1167 = vpop.f32.mrb[0].mxu0
      %v1168 = vadd.f32 %v1080, %v1167
      %v1169 = vpop.f32.mrb[0].mxu0
      %1170 = vmatprep.mubr.bf16.mxu0 0
      %1171 = vmatmul.mubr.bf16.gmra.mrb[0].mxu0 %v1042
      %v1172 = vpop.f32.mrb[0].mxu0
      %v1173 = vadd.f32 %v1080, %v1172
      %v1174 = vpop.f32.mrb[0].mxu0
      %v1175 = vpop.f32.mrb[0].mxu0
      %v1176 = vadd.f32 %v1080, %v1175
      %v1177 = vpop.f32.mrb[0].mxu0
      %1178 = vmatprep.mubr.bf16.mxu0 0
      %1179 = vmatmul.mubr.bf16.gmra.mrb[0].mxu0 %v1043
      %v1180 = vpop.f32.mrb[0].mxu0
      %v1181 = vadd.f32 %v1080, %v1180
      %v1182 = vpop.f32.mrb[0].mxu0
      %v1183 = vpop.f32.mrb[0].mxu0
      %v1184 = vadd.f32 %v1080, %v1183
      %v1185 = vpop.f32.mrb[0].mxu0
      %1186 = vmatprep.mubr.bf16.mxu0 0
      %1187 = vmatmul.mubr.bf16.gmra.mrb[0].mxu0 %v1044
      %v1188 = vpop.f32.mrb[0].mxu0
      %v1189 = vadd.f32 %v1080, %v1188
      %v1190 = vpop.f32.mrb[0].mxu0
      %v1191 = vpop.f32.mrb[0].mxu0
      %v1192 = vadd.f32 %v1080, %v1191
      %v1193 = vpop.f32.mrb[0].mxu0
      %1194 = vmatprep.mubr.bf16.mxu0 0
      %1195 = vmatmul.mubr.bf16.gmra.mrb[0].mxu0 %v1045
      %v1196 = vpop.f32.mrb[0].mxu0
      %v1197 = vadd.f32 %v1080, %v1196
      %v1198 = vpop.f32.mrb[0].mxu0
      %v1199 = vpop.f32.mrb[0].mxu0
      %v1200 = vadd.f32 %v1080, %v1199
      %v1201 = vpop.f32.mrb[0].mxu0
      %1202 = vmatprep.mubr.bf16.mxu0 0
      %1203 = vmatmul.mubr.bf16.gmra.mrb[0].mxu0 %v1046
      %v1204 = vpop.f32.mrb[0].mxu0
      %v1205 = vadd.f32 %v1080, %v1204
      %v1206 = vpop.f32.mrb[0].mxu0
      %v1207 = vpop.f32.mrb[0].mxu0
      %v1208 = vadd.f32 %v1080, %v1207
      %v1209 = vpop.f32.mrb[0].mxu0
      %1210 = vmatprep.mubr.bf16.mxu0 0
      %1211 = vmatmul.mubr.bf16.gmra.mrb[0].mxu0 %v1047
      %v1212 = vpop.f32.mrb[0].mxu0
      %v1213 = vadd.f32 %v1080, %v1212
      %v1214 = vpop.f32.mrb[0].mxu0
      %v1215 = vpop.f32.mrb[0].mxu0
      %v1216 = vadd.f32 %v1080, %v1215
      %v1217 = vpop.f32.mrb[0].mxu0
      %1218 = vmatprep.mubr.bf16.mxu0 0
      %1219 = vmatmul.mubr.bf16.gmra.mrb[0].mxu0 %v1048
      %v1220 = vpop.f32.mrb[0].mxu0
      %v1221 = vadd.f32 %v1080, %v1220
      %v1222 = vpop.f32.mrb[0].mxu0
      %v1223 = vpop.f32.mrb[0].mxu0
      %v1224 = vadd.f32 %v1080, %v1223
      %v1225 = vpop.f32.mrb[0].mxu0
      %1226 = vmatprep.mubr.bf16.mxu0 0
      %1227 = vmatmul.mubr.bf16.gmra.mrb[0].mxu0 %v1049
      %v1228 = vpop.f32.mrb[0].mxu0
      %v1229 = vadd.f32 %v1080, %v1228
      %v1230 = vpop.f32.mrb[0].mxu0
      %v1231 = vpop.f32.mrb[0].mxu0
      %v1232 = vadd.f32 %v1080, %v1231
      %v1233 = vpop.f32.mrb[0].mxu0
      %1234 = vmatprep.mubr.bf16.mxu0 0
      %1235 = vmatmul.mubr.bf16.gmra.mrb[0].mxu0 %v1050
      %v1236 = vpop.f32.mrb[0].mxu0
      %v1237 = vadd.f32 %v1080, %v1236
      %v1238 = vpop.f32.mrb[0].mxu0
      %v1239 = vpop.f32.mrb[0].mxu0
      %v1240 = vadd.f32 %v1080, %v1239
      %v1241 = vpop.f32.mrb[0].mxu0
      %1242 = vmatprep.mubr.bf16.mxu0 0
      %1243 = vmatmul.mubr.bf16.gmra.mrb[0].mxu0 %v1051
      %v1244 = vpop.f32.mrb[0].mxu0
      %v1245 = vadd.f32 %v1080, %v1244
      %v1246 = vpop.f32.mrb[0].mxu0
      %v1247 = vpop.f32.mrb[0].mxu0
      %v1248 = vadd.f32 %v1080, %v1247
      %v1249 = vpop.f32.mrb[0].mxu0
      %1250 = vmatprep.mubr.bf16.mxu0 0
      %1251 = vmatmul.mubr.bf16.gmra.mrb[0].mxu0 %v1052
      %v1252 = vpop.f32.mrb[0].mxu0
      %v1253 = vadd.f32 %v1080, %v1252
      %v1254 = vpop.f32.mrb[0].mxu0
      %v1255 = vpop.f32.mrb[0].mxu0
      %v1256 = vadd.f32 %v1080, %v1255
      %v1257 = vpop.f32.mrb[0].mxu0
      %1258 = vmatprep.mubr.bf16.mxu0 0
      %1259 = vmatmul.mubr.bf16.gmra.mrb[0].mxu0 %v1053
      %v1260 = vpop.f32.mrb[0].mxu0
      %v1261 = vadd.f32 %v1080, %v1260
      %v1262 = vpop.f32.mrb[0].mxu0
      %v1263 = vpop.f32.mrb[0].mxu0
      %v1264 = vadd.f32 %v1080, %v1263
      %v1265 = vpop.f32.mrb[0].mxu0
      %1266 = vmatprep.mubr.bf16.mxu0 0
      %1267 = vmatmul.mubr.bf16.gmra.mrb[0].mxu0 %v1054
      %v1268 = vpop.f32.mrb[0].mxu0
      %v1269 = vadd.f32 %v1080, %v1268
      %v1270 = vpop.f32.mrb[0].mxu0
      %v1271 = vpop.f32.mrb[0].mxu0
      %v1272 = vadd.f32 %v1080, %v1271
      %v1273 = vpop.f32.mrb[0].mxu0
      %1274 = vmatprep.mubr.bf16.mxu0 0
      %1275 = vmatmul.mubr.bf16.gmra.mrb[0].mxu0 %v1055
      %v1276 = vpop.f32.mrb[0].mxu0
      %v1277 = vadd.f32 %v1080, %v1276
      %v1278 = vpop.f32.mrb[0].mxu0
      %v1279 = vpop.f32.mrb[0].mxu0
      %v1280 = vadd.f32 %v1080, %v1279
      %v1281 = vpop.f32.mrb[0].mxu0
      %1282 = vmatprep.mubr.bf16.mxu0 0
      %1283 = vmatmul.mubr.bf16.gmra.mrb[0].mxu0 %v1056
      %v1284 = vpop.f32.mrb[0].mxu0
      %v1285 = vadd.f32 %v1080, %v1284
      %v1286 = vpop.f32.mrb[0].mxu0
      %v1287 = vpop.f32.mrb[0].mxu0
      %v1288 = vadd.f32 %v1080, %v1287
      %v1289 = vpop.f32.mrb[0].mxu0
      %1290 = vdwg.mxu0
      %v1291 = vmax.f32 %v1165, 0.0
      %v1292 = vmax.f32 %v1168, 0.0
      %v1293 = vmax.f32 %v1173, 0.0
      %v1294 = vmax.f32 %v1176, 0.0
      %v1295 = vmax.f32 %v1181, 0.0
      %v1296 = vmax.f32 %v1184, 0.0
      %v1297 = vmax.f32 %v1189, 0.0
      %v1298 = vmax.f32 %v1192, 0.0
      %v1299 = vmax.f32 %v1197, 0.0
      %v1300 = vmax.f32 %v1200, 0.0
      %v1301 = vmax.f32 %v1205, 0.0
      %v1302 = vmax.f32 %v1208, 0.0
      %v1303 = vmax.f32 %v1213, 0.0
      %v1304 = vmax.f32 %v1216, 0.0
      %v1305 = vmax.f32 %v1221, 0.0
      %v1306 = vmax.f32 %v1224, 0.0
      %v1307 = vmax.f32 %v1229, 0.0
      %v1308 = vmax.f32 %v1232, 0.0
      %v1309 = vmax.f32 %v1237, 0.0
      %v1310 = vmax.f32 %v1240, 0.0
      %v1311 = vmax.f32 %v1245, 0.0
      %v1312 = vmax.f32 %v1248, 0.0
      %v1313 = vmax.f32 %v1253, 0.0
      %v1314 = vmax.f32 %v1256, 0.0
      %v1315 = vmax.f32 %v1261, 0.0
      %v1316 = vmax.f32 %v1264, 0.0
      %v1317 = vmax.f32 %v1269, 0.0
      %v1318 = vmax.f32 %v1272, 0.0
      %v1319 = vmax.f32 %v1277, 0.0
      %v1320 = vmax.f32 %v1280, 0.0
      %v1321 = vmax.f32 %v1285, 0.0
      %v1322 = vmax.f32 %v1288, 0.0
      %v1323 = vpack.c.bf16 %v1292, %v1291
      %v1324 = vpack.c.bf16 %v1294, %v1293
      %v1325 = vpack.c.bf16 %v1296, %v1295
      %v1326 = vpack.c.bf16 %v1298, %v1297
      %v1327 = vpack.c.bf16 %v1300, %v1299
      %v1328 = vpack.c.bf16 %v1302, %v1301
      %v1329 = vpack.c.bf16 %v1304, %v1303
      %v1330 = vpack.c.bf16 %v1306, %v1305
      %v1331 = vpack.c.bf16 %v1308, %v1307
      %v1332 = vpack.c.bf16 %v1310, %v1309
      %v1333 = vpack.c.bf16 %v1312, %v1311
      %v1334 = vpack.c.bf16 %v1314, %v1313
      %v1335 = vpack.c.bf16 %v1316, %v1315
      %v1336 = vpack.c.bf16 %v1318, %v1317
      %v1337 = vpack.c.bf16 %v1320, %v1319
      %v1338 = vpack.c.bf16 %v1322, %v1321
      %s1339 = scalar_lea.vmem %s1, 256
      %v1340 = vld [vmem:[%s1339] sm:$0xf]
      %v1341 = vld [vmem:[%s1339 + $0x4] sm:$0xf]
      %v1342 = vld [vmem:[%s1339 + $0x8] sm:$0xf]
      %v1343 = vld [vmem:[%s1339 + $0xc] sm:$0xf]
      %v1344 = vld [vmem:[%s1339 + $0x10] sm:$0xf]
      %v1345 = vld [vmem:[%s1339 + $0x14] sm:$0xf]
      %v1346 = vld [vmem:[%s1339 + $0x18] sm:$0xf]
      %v1347 = vld [vmem:[%s1339 + $0x1c] sm:$0xf]
      %v1348 = vld [vmem:[%s1339 + $0x20] sm:$0xf]
      %v1349 = vld [vmem:[%s1339 + $0x24] sm:$0xf]
      %v1350 = vld [vmem:[%s1339 + $0x28] sm:$0xf]
      %v1351 = vld [vmem:[%s1339 + $0x2c] sm:$0xf]
      %v1352 = vld [vmem:[%s1339 + $0x30] sm:$0xf]
      %v1353 = vld [vmem:[%s1339 + $0x34] sm:$0xf]
      %v1354 = vld [vmem:[%s1339 + $0x38] sm:$0xf]
      %v1355 = vld [vmem:[%s1339 + $0x3c] sm:$0xf]
      %s1356 = scalar_lea.vmem %s2, 4
      %v1357 = vld [vmem:[%s1356] sm:$0x1]
      %v1359 = vlaneseq
      %v1360 = vshrl.u32 %v1359, 7
      %v1361 = vsub.s32 0, %v1360
      %v1362 = vrot.slane %v1357, %v1361
      %v1380 = vunpack.c.l.b16 %v1340
      %v1381 = vunpack.c.l.b16 %v1341
      %v1382 = vunpack.c.l.b16 %v1342
      %v1383 = vunpack.c.l.b16 %v1343
      %v1384 = vunpack.c.l.b16 %v1344
      %v1385 = vunpack.c.l.b16 %v1345
      %v1386 = vunpack.c.l.b16 %v1346
      %v1387 = vunpack.c.l.b16 %v1347
      %v1388 = vunpack.c.l.b16 %v1348
      %v1389 = vunpack.c.l.b16 %v1349
      %v1390 = vunpack.c.l.b16 %v1350
      %v1391 = vunpack.c.l.b16 %v1351
      %v1392 = vunpack.c.l.b16 %v1352
      %v1393 = vunpack.c.l.b16 %v1353
      %v1394 = vunpack.c.l.b16 %v1354
      %v1395 = vunpack.c.l.b16 %v1355
      %v1396 = vpack.c.b16 %v1381, %v1380
      %v1397 = vpack.c.b16 %v1383, %v1382
      %v1398 = vpack.c.b16 %v1385, %v1384
      %v1399 = vpack.c.b16 %v1387, %v1386
      %v1400 = vpack.c.b16 %v1389, %v1388
      %v1401 = vpack.c.b16 %v1391, %v1390
      %v1402 = vpack.c.b16 %v1393, %v1392
      %v1403 = vpack.c.b16 %v1395, %v1394
      %1412 = vmatprep.subr.bf16.mxu0 0
      %1413 = vmatpush1.bf16.msra.mxu0 %v1396
      %1414 = vmatprep.subr.bf16.mxu0 0
      %1415 = vmatpush1.bf16.msra.mxu0 %v1397
      %1416 = vmatprep.subr.bf16.mxu0 0
      %1417 = vmatpush1.bf16.msra.mxu0 %v1398
      %1418 = vmatprep.subr.bf16.mxu0 0
      %1419 = vmatpush1.bf16.msra.mxu0 %v1399
      %1420 = vmatprep.subr.bf16.mxu0 0
      %1421 = vmatpush1.bf16.msra.mxu0 %v1400
      %1422 = vmatprep.subr.bf16.mxu0 0
      %1423 = vmatpush1.bf16.msra.mxu0 %v1401
      %1424 = vmatprep.subr.bf16.mxu0 0
      %1425 = vmatpush1.bf16.msra.mxu0 %v1402
      %1426 = vmatprep.subr.bf16.mxu0 0
      %1427 = vmatpush1.bf16.msra.mxu0 %v1403
      %1428 = vmatprep.subr.bf16.mxu0 0
      %1429 = vmatpush1.bf16.msra.mxu0 0
      %1430 = vmatprep.subr.bf16.mxu0 0
      %1431 = vmatpush1.bf16.msra.mxu0 0
      %1432 = vmatprep.subr.bf16.mxu0 0
      %1433 = vmatpush1.bf16.msra.mxu0 0
      %1434 = vmatprep.subr.bf16.mxu0 0
      %1435 = vmatpush1.bf16.msra.mxu0 0
      %1436 = vmatprep.subr.bf16.mxu0 0
      %1437 = vmatpush1.bf16.msra.mxu0 0
      %1438 = vmatprep.subr.bf16.mxu0 0
      %1439 = vmatpush1.bf16.msra.mxu0 0
      %1440 = vmatprep.subr.bf16.mxu0 0
      %1441 = vmatpush1.bf16.msra.mxu0 0
      %1442 = vmatprep.subr.bf16.mxu0 0
      %1443 = vmatpush1.bf16.msra.mxu0 0
      %1444 = vmatprep.mubr.bf16.mxu0 0
      %1445 = vmatmul.mubr.bf16.gmra.mrb[0].mxu0 %v1323
      %v1446 = vpop.f32.mrb[0].mxu0
      %v1447 = vadd.f32 %v1362, %v1446
      %v1448 = vpop.f32.mrb[0].mxu0
      %v1449 = vpop.f32.mrb[0].mxu0
      %v1450 = vadd.f32 %v1362, %v1449
      %v1451 = vpop.f32.mrb[0].mxu0
      %1452 = vmatprep.mubr.bf16.mxu0 0
      %1453 = vmatmul.mubr.bf16.gmra.mrb[0].mxu0 %v1324
      %v1454 = vpop.f32.mrb[0].mxu0
      %v1455 = vadd.f32 %v1362, %v1454
      %v1456 = vpop.f32.mrb[0].mxu0
      %v1457 = vpop.f32.mrb[0].mxu0
      %v1458 = vadd.f32 %v1362, %v1457
      %v1459 = vpop.f32.mrb[0].mxu0
      %1460 = vmatprep.mubr.bf16.mxu0 0
      %1461 = vmatmul.mubr.bf16.gmra.mrb[0].mxu0 %v1325
      %v1462 = vpop.f32.mrb[0].mxu0
      %v1463 = vadd.f32 %v1362, %v1462
      %v1464 = vpop.f32.mrb[0].mxu0
      %v1465 = vpop.f32.mrb[0].mxu0
      %v1466 = vadd.f32 %v1362, %v1465
      %v1467 = vpop.f32.mrb[0].mxu0
      %1468 = vmatprep.mubr.bf16.mxu0 0
      %1469 = vmatmul.mubr.bf16.gmra.mrb[0].mxu0 %v1326
      %v1470 = vpop.f32.mrb[0].mxu0
      %v1471 = vadd.f32 %v1362, %v1470
      %v1472 = vpop.f32.mrb[0].mxu0
      %v1473 = vpop.f32.mrb[0].mxu0
      %v1474 = vadd.f32 %v1362, %v1473
      %v1475 = vpop.f32.mrb[0].mxu0
      %1476 = vmatprep.mubr.bf16.mxu0 0
      %1477 = vmatmul.mubr.bf16.gmra.mrb[0].mxu0 %v1327
      %v1478 = vpop.f32.mrb[0].mxu0
      %v1479 = vadd.f32 %v1362, %v1478
      %v1480 = vpop.f32.mrb[0].mxu0
      %v1481 = vpop.f32.mrb[0].mxu0
      %v1482 = vadd.f32 %v1362, %v1481
      %v1483 = vpop.f32.mrb[0].mxu0
      %1484 = vmatprep.mubr.bf16.mxu0 0
      %1485 = vmatmul.mubr.bf16.gmra.mrb[0].mxu0 %v1328
      %v1486 = vpop.f32.mrb[0].mxu0
      %v1487 = vadd.f32 %v1362, %v1486
      %v1488 = vpop.f32.mrb[0].mxu0
      %v1489 = vpop.f32.mrb[0].mxu0
      %v1490 = vadd.f32 %v1362, %v1489
      %v1491 = vpop.f32.mrb[0].mxu0
      %1492 = vmatprep.mubr.bf16.mxu0 0
      %1493 = vmatmul.mubr.bf16.gmra.mrb[0].mxu0 %v1329
      %v1494 = vpop.f32.mrb[0].mxu0
      %v1495 = vadd.f32 %v1362, %v1494
      %v1496 = vpop.f32.mrb[0].mxu0
      %v1497 = vpop.f32.mrb[0].mxu0
      %v1498 = vadd.f32 %v1362, %v1497
      %v1499 = vpop.f32.mrb[0].mxu0
      %1500 = vmatprep.mubr.bf16.mxu0 0
      %1501 = vmatmul.mubr.bf16.gmra.mrb[0].mxu0 %v1330
      %v1502 = vpop.f32.mrb[0].mxu0
      %v1503 = vadd.f32 %v1362, %v1502
      %v1504 = vpop.f32.mrb[0].mxu0
      %v1505 = vpop.f32.mrb[0].mxu0
      %v1506 = vadd.f32 %v1362, %v1505
      %v1507 = vpop.f32.mrb[0].mxu0
      %1508 = vmatprep.mubr.bf16.mxu0 0
      %1509 = vmatmul.mubr.bf16.gmra.mrb[0].mxu0 %v1331
      %v1510 = vpop.f32.mrb[0].mxu0
      %v1511 = vadd.f32 %v1362, %v1510
      %v1512 = vpop.f32.mrb[0].mxu0
      %v1513 = vpop.f32.mrb[0].mxu0
      %v1514 = vadd.f32 %v1362, %v1513
      %v1515 = vpop.f32.mrb[0].mxu0
      %1516 = vmatprep.mubr.bf16.mxu0 0
      %1517 = vmatmul.mubr.bf16.gmra.mrb[0].mxu0 %v1332
      %v1518 = vpop.f32.mrb[0].mxu0
      %v1519 = vadd.f32 %v1362, %v1518
      %v1520 = vpop.f32.mrb[0].mxu0
      %v1521 = vpop.f32.mrb[0].mxu0
      %v1522 = vadd.f32 %v1362, %v1521
      %v1523 = vpop.f32.mrb[0].mxu0
      %1524 = vmatprep.mubr.bf16.mxu0 0
      %1525 = vmatmul.mubr.bf16.gmra.mrb[0].mxu0 %v1333
      %v1526 = vpop.f32.mrb[0].mxu0
      %v1527 = vadd.f32 %v1362, %v1526
      %v1528 = vpop.f32.mrb[0].mxu0
      %v1529 = vpop.f32.mrb[0].mxu0
      %v1530 = vadd.f32 %v1362, %v1529
      %v1531 = vpop.f32.mrb[0].mxu0
      %1532 = vmatprep.mubr.bf16.mxu0 0
      %1533 = vmatmul.mubr.bf16.gmra.mrb[0].mxu0 %v1334
      %v1534 = vpop.f32.mrb[0].mxu0
      %v1535 = vadd.f32 %v1362, %v1534
      %v1536 = vpop.f32.mrb[0].mxu0
      %v1537 = vpop.f32.mrb[0].mxu0
      %v1538 = vadd.f32 %v1362, %v1537
      %v1539 = vpop.f32.mrb[0].mxu0
      %1540 = vmatprep.mubr.bf16.mxu0 0
      %1541 = vmatmul.mubr.bf16.gmra.mrb[0].mxu0 %v1335
      %v1542 = vpop.f32.mrb[0].mxu0
      %v1543 = vadd.f32 %v1362, %v1542
      %v1544 = vpop.f32.mrb[0].mxu0
      %v1545 = vpop.f32.mrb[0].mxu0
      %v1546 = vadd.f32 %v1362, %v1545
      %v1547 = vpop.f32.mrb[0].mxu0
      %1548 = vmatprep.mubr.bf16.mxu0 0
      %1549 = vmatmul.mubr.bf16.gmra.mrb[0].mxu0 %v1336
      %v1550 = vpop.f32.mrb[0].mxu0
      %v1551 = vadd.f32 %v1362, %v1550
      %v1552 = vpop.f32.mrb[0].mxu0
      %v1553 = vpop.f32.mrb[0].mxu0
      %v1554 = vadd.f32 %v1362, %v1553
      %v1555 = vpop.f32.mrb[0].mxu0
      %1556 = vmatprep.mubr.bf16.mxu0 0
      %1557 = vmatmul.mubr.bf16.gmra.mrb[0].mxu0 %v1337
      %v1558 = vpop.f32.mrb[0].mxu0
      %v1559 = vadd.f32 %v1362, %v1558
      %v1560 = vpop.f32.mrb[0].mxu0
      %v1561 = vpop.f32.mrb[0].mxu0
      %v1562 = vadd.f32 %v1362, %v1561
      %v1563 = vpop.f32.mrb[0].mxu0
      %1564 = vmatprep.mubr.bf16.mxu0 0
      %1565 = vmatmul.mubr.bf16.gmra.mrb[0].mxu0 %v1338
      %v1566 = vpop.f32.mrb[0].mxu0
      %v1567 = vadd.f32 %v1362, %v1566
      %v1568 = vpop.f32.mrb[0].mxu0
      %v1569 = vpop.f32.mrb[0].mxu0
      %v1570 = vadd.f32 %v1362, %v1569
      %v1571 = vpop.f32.mrb[0].mxu0
      %1572 = vdwg.mxu0
      %v1573 = vmax.f32 %v1447, 0.0
      %v1574 = vmax.f32 %v1450, 0.0
      %v1575 = vmax.f32 %v1455, 0.0
      %v1576 = vmax.f32 %v1458, 0.0
      %v1577 = vmax.f32 %v1463, 0.0
      %v1578 = vmax.f32 %v1466, 0.0
      %v1579 = vmax.f32 %v1471, 0.0
      %v1580 = vmax.f32 %v1474, 0.0
      %v1581 = vmax.f32 %v1479, 0.0
      %v1582 = vmax.f32 %v1482, 0.0
      %v1583 = vmax.f32 %v1487, 0.0
      %v1584 = vmax.f32 %v1490, 0.0
      %v1585 = vmax.f32 %v1495, 0.0
      %v1586 = vmax.f32 %v1498, 0.0
      %v1587 = vmax.f32 %v1503, 0.0
      %v1588 = vmax.f32 %v1506, 0.0
      %v1589 = vmax.f32 %v1511, 0.0
      %v1590 = vmax.f32 %v1514, 0.0
      %v1591 = vmax.f32 %v1519, 0.0
      %v1592 = vmax.f32 %v1522, 0.0
      %v1593 = vmax.f32 %v1527, 0.0
      %v1594 = vmax.f32 %v1530, 0.0
      %v1595 = vmax.f32 %v1535, 0.0
      %v1596 = vmax.f32 %v1538, 0.0
      %v1597 = vmax.f32 %v1543, 0.0
      %v1598 = vmax.f32 %v1546, 0.0
      %v1599 = vmax.f32 %v1551, 0.0
      %v1600 = vmax.f32 %v1554, 0.0
      %v1601 = vmax.f32 %v1559, 0.0
      %v1602 = vmax.f32 %v1562, 0.0
      %v1603 = vmax.f32 %v1567, 0.0
      %v1604 = vmax.f32 %v1570, 0.0
      %v1605 = vpack.c.bf16 %v1574, %v1573
      %v1606 = vpack.c.bf16 %v1576, %v1575
      %v1607 = vpack.c.bf16 %v1578, %v1577
      %v1608 = vpack.c.bf16 %v1580, %v1579
      %v1609 = vpack.c.bf16 %v1582, %v1581
      %v1610 = vpack.c.bf16 %v1584, %v1583
      %v1611 = vpack.c.bf16 %v1586, %v1585
      %v1612 = vpack.c.bf16 %v1588, %v1587
      %v1613 = vpack.c.bf16 %v1590, %v1589
      %v1614 = vpack.c.bf16 %v1592, %v1591
      %v1615 = vpack.c.bf16 %v1594, %v1593
      %v1616 = vpack.c.bf16 %v1596, %v1595
      %v1617 = vpack.c.bf16 %v1598, %v1597
      %v1618 = vpack.c.bf16 %v1600, %v1599
      %v1619 = vpack.c.bf16 %v1602, %v1601
      %v1620 = vpack.c.bf16 %v1604, %v1603
      %s1621 = scalar_lea.vmem %s1, 320
      %v1622 = vld [vmem:[%s1621] sm:$0xf]
      %v1623 = vld [vmem:[%s1621 + $0x4] sm:$0xf]
      %v1624 = vld [vmem:[%s1621 + $0x8] sm:$0xf]
      %v1625 = vld [vmem:[%s1621 + $0xc] sm:$0xf]
      %v1626 = vld [vmem:[%s1621 + $0x10] sm:$0xf]
      %v1627 = vld [vmem:[%s1621 + $0x14] sm:$0xf]
      %v1628 = vld [vmem:[%s1621 + $0x18] sm:$0xf]
      %v1629 = vld [vmem:[%s1621 + $0x1c] sm:$0xf]
      %v1630 = vld [vmem:[%s1621 + $0x20] sm:$0xf]
      %v1631 = vld [vmem:[%s1621 + $0x24] sm:$0xf]
      %v1632 = vld [vmem:[%s1621 + $0x28] sm:$0xf]
      %v1633 = vld [vmem:[%s1621 + $0x2c] sm:$0xf]
      %v1634 = vld [vmem:[%s1621 + $0x30] sm:$0xf]
      %v1635 = vld [vmem:[%s1621 + $0x34] sm:$0xf]
      %v1636 = vld [vmem:[%s1621 + $0x38] sm:$0xf]
      %v1637 = vld [vmem:[%s1621 + $0x3c] sm:$0xf]
      %s1638 = scalar_lea.vmem %s2, 5
      %v1639 = vld [vmem:[%s1638] sm:$0x1]
      %v1641 = vlaneseq
      %v1642 = vshrl.u32 %v1641, 7
      %v1643 = vsub.s32 0, %v1642
      %v1644 = vrot.slane %v1639, %v1643
      %v1662 = vunpack.c.l.b16 %v1622
      %v1663 = vunpack.c.l.b16 %v1623
      %v1664 = vunpack.c.l.b16 %v1624
      %v1665 = vunpack.c.l.b16 %v1625
      %v1666 = vunpack.c.l.b16 %v1626
      %v1667 = vunpack.c.l.b16 %v1627
      %v1668 = vunpack.c.l.b16 %v1628
      %v1669 = vunpack.c.l.b16 %v1629
      %v1670 = vunpack.c.l.b16 %v1630
      %v1671 = vunpack.c.l.b16 %v1631
      %v1672 = vunpack.c.l.b16 %v1632
      %v1673 = vunpack.c.l.b16 %v1633
      %v1674 = vunpack.c.l.b16 %v1634
      %v1675 = vunpack.c.l.b16 %v1635
      %v1676 = vunpack.c.l.b16 %v1636
      %v1677 = vunpack.c.l.b16 %v1637
      %v1678 = vpack.c.b16 %v1663, %v1662
      %v1679 = vpack.c.b16 %v1665, %v1664
      %v1680 = vpack.c.b16 %v1667, %v1666
      %v1681 = vpack.c.b16 %v1669, %v1668
      %v1682 = vpack.c.b16 %v1671, %v1670
      %v1683 = vpack.c.b16 %v1673, %v1672
      %v1684 = vpack.c.b16 %v1675, %v1674
      %v1685 = vpack.c.b16 %v1677, %v1676
      %1694 = vmatprep.subr.bf16.mxu0 0
      %1695 = vmatpush1.bf16.msra.mxu0 %v1678
      %1696 = vmatprep.subr.bf16.mxu0 0
      %1697 = vmatpush1.bf16.msra.mxu0 %v1679
      %1698 = vmatprep.subr.bf16.mxu0 0
      %1699 = vmatpush1.bf16.msra.mxu0 %v1680
      %1700 = vmatprep.subr.bf16.mxu0 0
      %1701 = vmatpush1.bf16.msra.mxu0 %v1681
      %1702 = vmatprep.subr.bf16.mxu0 0
      %1703 = vmatpush1.bf16.msra.mxu0 %v1682
      %1704 = vmatprep.subr.bf16.mxu0 0
      %1705 = vmatpush1.bf16.msra.mxu0 %v1683
      %1706 = vmatprep.subr.bf16.mxu0 0
      %1707 = vmatpush1.bf16.msra.mxu0 %v1684
      %1708 = vmatprep.subr.bf16.mxu0 0
      %1709 = vmatpush1.bf16.msra.mxu0 %v1685
      %1710 = vmatprep.subr.bf16.mxu0 0
      %1711 = vmatpush1.bf16.msra.mxu0 0
      %1712 = vmatprep.subr.bf16.mxu0 0
      %1713 = vmatpush1.bf16.msra.mxu0 0
      %1714 = vmatprep.subr.bf16.mxu0 0
      %1715 = vmatpush1.bf16.msra.mxu0 0
      %1716 = vmatprep.subr.bf16.mxu0 0
      %1717 = vmatpush1.bf16.msra.mxu0 0
      %1718 = vmatprep.subr.bf16.mxu0 0
      %1719 = vmatpush1.bf16.msra.mxu0 0
      %1720 = vmatprep.subr.bf16.mxu0 0
      %1721 = vmatpush1.bf16.msra.mxu0 0
      %1722 = vmatprep.subr.bf16.mxu0 0
      %1723 = vmatpush1.bf16.msra.mxu0 0
      %1724 = vmatprep.subr.bf16.mxu0 0
      %1725 = vmatpush1.bf16.msra.mxu0 0
      %1726 = vmatprep.mubr.bf16.mxu0 0
      %1727 = vmatmul.mubr.bf16.gmra.mrb[0].mxu0 %v1605
      %v1728 = vpop.f32.mrb[0].mxu0
      %v1729 = vadd.f32 %v1644, %v1728
      %v1730 = vpop.f32.mrb[0].mxu0
      %v1731 = vpop.f32.mrb[0].mxu0
      %v1732 = vadd.f32 %v1644, %v1731
      %v1733 = vpop.f32.mrb[0].mxu0
      %1734 = vmatprep.mubr.bf16.mxu0 0
      %1735 = vmatmul.mubr.bf16.gmra.mrb[0].mxu0 %v1606
      %v1736 = vpop.f32.mrb[0].mxu0
      %v1737 = vadd.f32 %v1644, %v1736
      %v1738 = vpop.f32.mrb[0].mxu0
      %v1739 = vpop.f32.mrb[0].mxu0
      %v1740 = vadd.f32 %v1644, %v1739
      %v1741 = vpop.f32.mrb[0].mxu0
      %1742 = vmatprep.mubr.bf16.mxu0 0
      %1743 = vmatmul.mubr.bf16.gmra.mrb[0].mxu0 %v1607
      %v1744 = vpop.f32.mrb[0].mxu0
      %v1745 = vadd.f32 %v1644, %v1744
      %v1746 = vpop.f32.mrb[0].mxu0
      %v1747 = vpop.f32.mrb[0].mxu0
      %v1748 = vadd.f32 %v1644, %v1747
      %v1749 = vpop.f32.mrb[0].mxu0
      %1750 = vmatprep.mubr.bf16.mxu0 0
      %1751 = vmatmul.mubr.bf16.gmra.mrb[0].mxu0 %v1608
      %v1752 = vpop.f32.mrb[0].mxu0
      %v1753 = vadd.f32 %v1644, %v1752
      %v1754 = vpop.f32.mrb[0].mxu0
      %v1755 = vpop.f32.mrb[0].mxu0
      %v1756 = vadd.f32 %v1644, %v1755
      %v1757 = vpop.f32.mrb[0].mxu0
      %1758 = vmatprep.mubr.bf16.mxu0 0
      %1759 = vmatmul.mubr.bf16.gmra.mrb[0].mxu0 %v1609
      %v1760 = vpop.f32.mrb[0].mxu0
      %v1761 = vadd.f32 %v1644, %v1760
      %v1762 = vpop.f32.mrb[0].mxu0
      %v1763 = vpop.f32.mrb[0].mxu0
      %v1764 = vadd.f32 %v1644, %v1763
      %v1765 = vpop.f32.mrb[0].mxu0
      %1766 = vmatprep.mubr.bf16.mxu0 0
      %1767 = vmatmul.mubr.bf16.gmra.mrb[0].mxu0 %v1610
      %v1768 = vpop.f32.mrb[0].mxu0
      %v1769 = vadd.f32 %v1644, %v1768
      %v1770 = vpop.f32.mrb[0].mxu0
      %v1771 = vpop.f32.mrb[0].mxu0
      %v1772 = vadd.f32 %v1644, %v1771
      %v1773 = vpop.f32.mrb[0].mxu0
      %1774 = vmatprep.mubr.bf16.mxu0 0
      %1775 = vmatmul.mubr.bf16.gmra.mrb[0].mxu0 %v1611
      %v1776 = vpop.f32.mrb[0].mxu0
      %v1777 = vadd.f32 %v1644, %v1776
      %v1778 = vpop.f32.mrb[0].mxu0
      %v1779 = vpop.f32.mrb[0].mxu0
      %v1780 = vadd.f32 %v1644, %v1779
      %v1781 = vpop.f32.mrb[0].mxu0
      %1782 = vmatprep.mubr.bf16.mxu0 0
      %1783 = vmatmul.mubr.bf16.gmra.mrb[0].mxu0 %v1612
      %v1784 = vpop.f32.mrb[0].mxu0
      %v1785 = vadd.f32 %v1644, %v1784
      %v1786 = vpop.f32.mrb[0].mxu0
      %v1787 = vpop.f32.mrb[0].mxu0
      %v1788 = vadd.f32 %v1644, %v1787
      %v1789 = vpop.f32.mrb[0].mxu0
      %1790 = vmatprep.mubr.bf16.mxu0 0
      %1791 = vmatmul.mubr.bf16.gmra.mrb[0].mxu0 %v1613
      %v1792 = vpop.f32.mrb[0].mxu0
      %v1793 = vadd.f32 %v1644, %v1792
      %v1794 = vpop.f32.mrb[0].mxu0
      %v1795 = vpop.f32.mrb[0].mxu0
      %v1796 = vadd.f32 %v1644, %v1795
      %v1797 = vpop.f32.mrb[0].mxu0
      %1798 = vmatprep.mubr.bf16.mxu0 0
      %1799 = vmatmul.mubr.bf16.gmra.mrb[0].mxu0 %v1614
      %v1800 = vpop.f32.mrb[0].mxu0
      %v1801 = vadd.f32 %v1644, %v1800
      %v1802 = vpop.f32.mrb[0].mxu0
      %v1803 = vpop.f32.mrb[0].mxu0
      %v1804 = vadd.f32 %v1644, %v1803
      %v1805 = vpop.f32.mrb[0].mxu0
      %1806 = vmatprep.mubr.bf16.mxu0 0
      %1807 = vmatmul.mubr.bf16.gmra.mrb[0].mxu0 %v1615
      %v1808 = vpop.f32.mrb[0].mxu0
      %v1809 = vadd.f32 %v1644, %v1808
      %v1810 = vpop.f32.mrb[0].mxu0
      %v1811 = vpop.f32.mrb[0].mxu0
      %v1812 = vadd.f32 %v1644, %v1811
      %v1813 = vpop.f32.mrb[0].mxu0
      %1814 = vmatprep.mubr.bf16.mxu0 0
      %1815 = vmatmul.mubr.bf16.gmra.mrb[0].mxu0 %v1616
      %v1816 = vpop.f32.mrb[0].mxu0
      %v1817 = vadd.f32 %v1644, %v1816
      %v1818 = vpop.f32.mrb[0].mxu0
      %v1819 = vpop.f32.mrb[0].mxu0
      %v1820 = vadd.f32 %v1644, %v1819
      %v1821 = vpop.f32.mrb[0].mxu0
      %1822 = vmatprep.mubr.bf16.mxu0 0
      %1823 = vmatmul.mubr.bf16.gmra.mrb[0].mxu0 %v1617
      %v1824 = vpop.f32.mrb[0].mxu0
      %v1825 = vadd.f32 %v1644, %v1824
      %v1826 = vpop.f32.mrb[0].mxu0
      %v1827 = vpop.f32.mrb[0].mxu0
      %v1828 = vadd.f32 %v1644, %v1827
      %v1829 = vpop.f32.mrb[0].mxu0
      %1830 = vmatprep.mubr.bf16.mxu0 0
      %1831 = vmatmul.mubr.bf16.gmra.mrb[0].mxu0 %v1618
      %v1832 = vpop.f32.mrb[0].mxu0
      %v1833 = vadd.f32 %v1644, %v1832
      %v1834 = vpop.f32.mrb[0].mxu0
      %v1835 = vpop.f32.mrb[0].mxu0
      %v1836 = vadd.f32 %v1644, %v1835
      %v1837 = vpop.f32.mrb[0].mxu0
      %1838 = vmatprep.mubr.bf16.mxu0 0
      %1839 = vmatmul.mubr.bf16.gmra.mrb[0].mxu0 %v1619
      %v1840 = vpop.f32.mrb[0].mxu0
      %v1841 = vadd.f32 %v1644, %v1840
      %v1842 = vpop.f32.mrb[0].mxu0
      %v1843 = vpop.f32.mrb[0].mxu0
      %v1844 = vadd.f32 %v1644, %v1843
      %v1845 = vpop.f32.mrb[0].mxu0
      %1846 = vmatprep.mubr.bf16.mxu0 0
      %1847 = vmatmul.mubr.bf16.gmra.mrb[0].mxu0 %v1620
      %v1848 = vpop.f32.mrb[0].mxu0
      %v1849 = vadd.f32 %v1644, %v1848
      %v1850 = vpop.f32.mrb[0].mxu0
      %v1851 = vpop.f32.mrb[0].mxu0
      %v1852 = vadd.f32 %v1644, %v1851
      %v1853 = vpop.f32.mrb[0].mxu0
      %1854 = vdwg.mxu0
      %v1855 = vmax.f32 %v1729, 0.0
      %v1856 = vmax.f32 %v1732, 0.0
      %v1857 = vmax.f32 %v1737, 0.0
      %v1858 = vmax.f32 %v1740, 0.0
      %v1859 = vmax.f32 %v1745, 0.0
      %v1860 = vmax.f32 %v1748, 0.0
      %v1861 = vmax.f32 %v1753, 0.0
      %v1862 = vmax.f32 %v1756, 0.0
      %v1863 = vmax.f32 %v1761, 0.0
      %v1864 = vmax.f32 %v1764, 0.0
      %v1865 = vmax.f32 %v1769, 0.0
      %v1866 = vmax.f32 %v1772, 0.0
      %v1867 = vmax.f32 %v1777, 0.0
      %v1868 = vmax.f32 %v1780, 0.0
      %v1869 = vmax.f32 %v1785, 0.0
      %v1870 = vmax.f32 %v1788, 0.0
      %v1871 = vmax.f32 %v1793, 0.0
      %v1872 = vmax.f32 %v1796, 0.0
      %v1873 = vmax.f32 %v1801, 0.0
      %v1874 = vmax.f32 %v1804, 0.0
      %v1875 = vmax.f32 %v1809, 0.0
      %v1876 = vmax.f32 %v1812, 0.0
      %v1877 = vmax.f32 %v1817, 0.0
      %v1878 = vmax.f32 %v1820, 0.0
      %v1879 = vmax.f32 %v1825, 0.0
      %v1880 = vmax.f32 %v1828, 0.0
      %v1881 = vmax.f32 %v1833, 0.0
      %v1882 = vmax.f32 %v1836, 0.0
      %v1883 = vmax.f32 %v1841, 0.0
      %v1884 = vmax.f32 %v1844, 0.0
      %v1885 = vmax.f32 %v1849, 0.0
      %v1886 = vmax.f32 %v1852, 0.0
      %v1887 = vpack.c.bf16 %v1856, %v1855
      %v1888 = vpack.c.bf16 %v1858, %v1857
      %v1889 = vpack.c.bf16 %v1860, %v1859
      %v1890 = vpack.c.bf16 %v1862, %v1861
      %v1891 = vpack.c.bf16 %v1864, %v1863
      %v1892 = vpack.c.bf16 %v1866, %v1865
      %v1893 = vpack.c.bf16 %v1868, %v1867
      %v1894 = vpack.c.bf16 %v1870, %v1869
      %v1895 = vpack.c.bf16 %v1872, %v1871
      %v1896 = vpack.c.bf16 %v1874, %v1873
      %v1897 = vpack.c.bf16 %v1876, %v1875
      %v1898 = vpack.c.bf16 %v1878, %v1877
      %v1899 = vpack.c.bf16 %v1880, %v1879
      %v1900 = vpack.c.bf16 %v1882, %v1881
      %v1901 = vpack.c.bf16 %v1884, %v1883
      %v1902 = vpack.c.bf16 %v1886, %v1885
      %s1903 = scalar_lea.vmem %s1, 384
      %v1904 = vld [vmem:[%s1903] sm:$0xf]
      %v1905 = vld [vmem:[%s1903 + $0x4] sm:$0xf]
      %v1906 = vld [vmem:[%s1903 + $0x8] sm:$0xf]
      %v1907 = vld [vmem:[%s1903 + $0xc] sm:$0xf]
      %v1908 = vld [vmem:[%s1903 + $0x10] sm:$0xf]
      %v1909 = vld [vmem:[%s1903 + $0x14] sm:$0xf]
      %v1910 = vld [vmem:[%s1903 + $0x18] sm:$0xf]
      %v1911 = vld [vmem:[%s1903 + $0x1c] sm:$0xf]
      %v1912 = vld [vmem:[%s1903 + $0x20] sm:$0xf]
      %v1913 = vld [vmem:[%s1903 + $0x24] sm:$0xf]
      %v1914 = vld [vmem:[%s1903 + $0x28] sm:$0xf]
      %v1915 = vld [vmem:[%s1903 + $0x2c] sm:$0xf]
      %v1916 = vld [vmem:[%s1903 + $0x30] sm:$0xf]
      %v1917 = vld [vmem:[%s1903 + $0x34] sm:$0xf]
      %v1918 = vld [vmem:[%s1903 + $0x38] sm:$0xf]
      %v1919 = vld [vmem:[%s1903 + $0x3c] sm:$0xf]
      %s1920 = scalar_lea.vmem %s2, 6
      %v1921 = vld [vmem:[%s1920] sm:$0x1]
      %v1923 = vlaneseq
      %v1924 = vshrl.u32 %v1923, 7
      %v1925 = vsub.s32 0, %v1924
      %v1926 = vrot.slane %v1921, %v1925
      %v1944 = vunpack.c.l.b16 %v1904
      %v1945 = vunpack.c.l.b16 %v1905
      %v1946 = vunpack.c.l.b16 %v1906
      %v1947 = vunpack.c.l.b16 %v1907
      %v1948 = vunpack.c.l.b16 %v1908
      %v1949 = vunpack.c.l.b16 %v1909
      %v1950 = vunpack.c.l.b16 %v1910
      %v1951 = vunpack.c.l.b16 %v1911
      %v1952 = vunpack.c.l.b16 %v1912
      %v1953 = vunpack.c.l.b16 %v1913
      %v1954 = vunpack.c.l.b16 %v1914
      %v1955 = vunpack.c.l.b16 %v1915
      %v1956 = vunpack.c.l.b16 %v1916
      %v1957 = vunpack.c.l.b16 %v1917
      %v1958 = vunpack.c.l.b16 %v1918
      %v1959 = vunpack.c.l.b16 %v1919
      %v1960 = vpack.c.b16 %v1945, %v1944
      %v1961 = vpack.c.b16 %v1947, %v1946
      %v1962 = vpack.c.b16 %v1949, %v1948
      %v1963 = vpack.c.b16 %v1951, %v1950
      %v1964 = vpack.c.b16 %v1953, %v1952
      %v1965 = vpack.c.b16 %v1955, %v1954
      %v1966 = vpack.c.b16 %v1957, %v1956
      %v1967 = vpack.c.b16 %v1959, %v1958
      %1976 = vmatprep.subr.bf16.mxu0 0
      %1977 = vmatpush1.bf16.msra.mxu0 %v1960
      %1978 = vmatprep.subr.bf16.mxu0 0
      %1979 = vmatpush1.bf16.msra.mxu0 %v1961
      %1980 = vmatprep.subr.bf16.mxu0 0
      %1981 = vmatpush1.bf16.msra.mxu0 %v1962
      %1982 = vmatprep.subr.bf16.mxu0 0
      %1983 = vmatpush1.bf16.msra.mxu0 %v1963
      %1984 = vmatprep.subr.bf16.mxu0 0
      %1985 = vmatpush1.bf16.msra.mxu0 %v1964
      %1986 = vmatprep.subr.bf16.mxu0 0
      %1987 = vmatpush1.bf16.msra.mxu0 %v1965
      %1988 = vmatprep.subr.bf16.mxu0 0
      %1989 = vmatpush1.bf16.msra.mxu0 %v1966
      %1990 = vmatprep.subr.bf16.mxu0 0
      %1991 = vmatpush1.bf16.msra.mxu0 %v1967
      %1992 = vmatprep.subr.bf16.mxu0 0
      %1993 = vmatpush1.bf16.msra.mxu0 0
      %1994 = vmatprep.subr.bf16.mxu0 0
      %1995 = vmatpush1.bf16.msra.mxu0 0
      %1996 = vmatprep.subr.bf16.mxu0 0
      %1997 = vmatpush1.bf16.msra.mxu0 0
      %1998 = vmatprep.subr.bf16.mxu0 0
      %1999 = vmatpush1.bf16.msra.mxu0 0
      %2000 = vmatprep.subr.bf16.mxu0 0
      %2001 = vmatpush1.bf16.msra.mxu0 0
      %2002 = vmatprep.subr.bf16.mxu0 0
      %2003 = vmatpush1.bf16.msra.mxu0 0
      %2004 = vmatprep.subr.bf16.mxu0 0
      %2005 = vmatpush1.bf16.msra.mxu0 0
      %2006 = vmatprep.subr.bf16.mxu0 0
      %2007 = vmatpush1.bf16.msra.mxu0 0
      %2008 = vmatprep.mubr.bf16.mxu0 0
      %2009 = vmatmul.mubr.bf16.gmra.mrb[0].mxu0 %v1887
      %v2010 = vpop.f32.mrb[0].mxu0
      %v2011 = vadd.f32 %v1926, %v2010
      %v2012 = vpop.f32.mrb[0].mxu0
      %v2013 = vpop.f32.mrb[0].mxu0
      %v2014 = vadd.f32 %v1926, %v2013
      %v2015 = vpop.f32.mrb[0].mxu0
      %2016 = vmatprep.mubr.bf16.mxu0 0
      %2017 = vmatmul.mubr.bf16.gmra.mrb[0].mxu0 %v1888
      %v2018 = vpop.f32.mrb[0].mxu0
      %v2019 = vadd.f32 %v1926, %v2018
      %v2020 = vpop.f32.mrb[0].mxu0
      %v2021 = vpop.f32.mrb[0].mxu0
      %v2022 = vadd.f32 %v1926, %v2021
      %v2023 = vpop.f32.mrb[0].mxu0
      %2024 = vmatprep.mubr.bf16.mxu0 0
      %2025 = vmatmul.mubr.bf16.gmra.mrb[0].mxu0 %v1889
      %v2026 = vpop.f32.mrb[0].mxu0
      %v2027 = vadd.f32 %v1926, %v2026
      %v2028 = vpop.f32.mrb[0].mxu0
      %v2029 = vpop.f32.mrb[0].mxu0
      %v2030 = vadd.f32 %v1926, %v2029
      %v2031 = vpop.f32.mrb[0].mxu0
      %2032 = vmatprep.mubr.bf16.mxu0 0
      %2033 = vmatmul.mubr.bf16.gmra.mrb[0].mxu0 %v1890
      %v2034 = vpop.f32.mrb[0].mxu0
      %v2035 = vadd.f32 %v1926, %v2034
      %v2036 = vpop.f32.mrb[0].mxu0
      %v2037 = vpop.f32.mrb[0].mxu0
      %v2038 = vadd.f32 %v1926, %v2037
      %v2039 = vpop.f32.mrb[0].mxu0
      %2040 = vmatprep.mubr.bf16.mxu0 0
      %2041 = vmatmul.mubr.bf16.gmra.mrb[0].mxu0 %v1891
      %v2042 = vpop.f32.mrb[0].mxu0
      %v2043 = vadd.f32 %v1926, %v2042
      %v2044 = vpop.f32.mrb[0].mxu0
      %v2045 = vpop.f32.mrb[0].mxu0
      %v2046 = vadd.f32 %v1926, %v2045
      %v2047 = vpop.f32.mrb[0].mxu0
      %2048 = vmatprep.mubr.bf16.mxu0 0
      %2049 = vmatmul.mubr.bf16.gmra.mrb[0].mxu0 %v1892
      %v2050 = vpop.f32.mrb[0].mxu0
      %v2051 = vadd.f32 %v1926, %v2050
      %v2052 = vpop.f32.mrb[0].mxu0
      %v2053 = vpop.f32.mrb[0].mxu0
      %v2054 = vadd.f32 %v1926, %v2053
      %v2055 = vpop.f32.mrb[0].mxu0
      %2056 = vmatprep.mubr.bf16.mxu0 0
      %2057 = vmatmul.mubr.bf16.gmra.mrb[0].mxu0 %v1893
      %v2058 = vpop.f32.mrb[0].mxu0
      %v2059 = vadd.f32 %v1926, %v2058
      %v2060 = vpop.f32.mrb[0].mxu0
      %v2061 = vpop.f32.mrb[0].mxu0
      %v2062 = vadd.f32 %v1926, %v2061
      %v2063 = vpop.f32.mrb[0].mxu0
      %2064 = vmatprep.mubr.bf16.mxu0 0
      %2065 = vmatmul.mubr.bf16.gmra.mrb[0].mxu0 %v1894
      %v2066 = vpop.f32.mrb[0].mxu0
      %v2067 = vadd.f32 %v1926, %v2066
      %v2068 = vpop.f32.mrb[0].mxu0
      %v2069 = vpop.f32.mrb[0].mxu0
      %v2070 = vadd.f32 %v1926, %v2069
      %v2071 = vpop.f32.mrb[0].mxu0
      %2072 = vmatprep.mubr.bf16.mxu0 0
      %2073 = vmatmul.mubr.bf16.gmra.mrb[0].mxu0 %v1895
      %v2074 = vpop.f32.mrb[0].mxu0
      %v2075 = vadd.f32 %v1926, %v2074
      %v2076 = vpop.f32.mrb[0].mxu0
      %v2077 = vpop.f32.mrb[0].mxu0
      %v2078 = vadd.f32 %v1926, %v2077
      %v2079 = vpop.f32.mrb[0].mxu0
      %2080 = vmatprep.mubr.bf16.mxu0 0
      %2081 = vmatmul.mubr.bf16.gmra.mrb[0].mxu0 %v1896
      %v2082 = vpop.f32.mrb[0].mxu0
      %v2083 = vadd.f32 %v1926, %v2082
      %v2084 = vpop.f32.mrb[0].mxu0
      %v2085 = vpop.f32.mrb[0].mxu0
      %v2086 = vadd.f32 %v1926, %v2085
      %v2087 = vpop.f32.mrb[0].mxu0
      %2088 = vmatprep.mubr.bf16.mxu0 0
      %2089 = vmatmul.mubr.bf16.gmra.mrb[0].mxu0 %v1897
      %v2090 = vpop.f32.mrb[0].mxu0
      %v2091 = vadd.f32 %v1926, %v2090
      %v2092 = vpop.f32.mrb[0].mxu0
      %v2093 = vpop.f32.mrb[0].mxu0
      %v2094 = vadd.f32 %v1926, %v2093
      %v2095 = vpop.f32.mrb[0].mxu0
      %2096 = vmatprep.mubr.bf16.mxu0 0
      %2097 = vmatmul.mubr.bf16.gmra.mrb[0].mxu0 %v1898
      %v2098 = vpop.f32.mrb[0].mxu0
      %v2099 = vadd.f32 %v1926, %v2098
      %v2100 = vpop.f32.mrb[0].mxu0
      %v2101 = vpop.f32.mrb[0].mxu0
      %v2102 = vadd.f32 %v1926, %v2101
      %v2103 = vpop.f32.mrb[0].mxu0
      %2104 = vmatprep.mubr.bf16.mxu0 0
      %2105 = vmatmul.mubr.bf16.gmra.mrb[0].mxu0 %v1899
      %v2106 = vpop.f32.mrb[0].mxu0
      %v2107 = vadd.f32 %v1926, %v2106
      %v2108 = vpop.f32.mrb[0].mxu0
      %v2109 = vpop.f32.mrb[0].mxu0
      %v2110 = vadd.f32 %v1926, %v2109
      %v2111 = vpop.f32.mrb[0].mxu0
      %2112 = vmatprep.mubr.bf16.mxu0 0
      %2113 = vmatmul.mubr.bf16.gmra.mrb[0].mxu0 %v1900
      %v2114 = vpop.f32.mrb[0].mxu0
      %v2115 = vadd.f32 %v1926, %v2114
      %v2116 = vpop.f32.mrb[0].mxu0
      %v2117 = vpop.f32.mrb[0].mxu0
      %v2118 = vadd.f32 %v1926, %v2117
      %v2119 = vpop.f32.mrb[0].mxu0
      %2120 = vmatprep.mubr.bf16.mxu0 0
      %2121 = vmatmul.mubr.bf16.gmra.mrb[0].mxu0 %v1901
      %v2122 = vpop.f32.mrb[0].mxu0
      %v2123 = vadd.f32 %v1926, %v2122
      %v2124 = vpop.f32.mrb[0].mxu0
      %v2125 = vpop.f32.mrb[0].mxu0
      %v2126 = vadd.f32 %v1926, %v2125
      %v2127 = vpop.f32.mrb[0].mxu0
      %2128 = vmatprep.mubr.bf16.mxu0 0
      %2129 = vmatmul.mubr.bf16.gmra.mrb[0].mxu0 %v1902
      %v2130 = vpop.f32.mrb[0].mxu0
      %v2131 = vadd.f32 %v1926, %v2130
      %v2132 = vpop.f32.mrb[0].mxu0
      %v2133 = vpop.f32.mrb[0].mxu0
      %v2134 = vadd.f32 %v1926, %v2133
      %v2135 = vpop.f32.mrb[0].mxu0
      %2136 = vdwg.mxu0
      %v2137 = vmax.f32 %v2011, 0.0
      %v2138 = vmax.f32 %v2014, 0.0
      %v2139 = vmax.f32 %v2019, 0.0
      %v2140 = vmax.f32 %v2022, 0.0
      %v2141 = vmax.f32 %v2027, 0.0
      %v2142 = vmax.f32 %v2030, 0.0
      %v2143 = vmax.f32 %v2035, 0.0
      %v2144 = vmax.f32 %v2038, 0.0
      %v2145 = vmax.f32 %v2043, 0.0
      %v2146 = vmax.f32 %v2046, 0.0
      %v2147 = vmax.f32 %v2051, 0.0
      %v2148 = vmax.f32 %v2054, 0.0
      %v2149 = vmax.f32 %v2059, 0.0
      %v2150 = vmax.f32 %v2062, 0.0
      %v2151 = vmax.f32 %v2067, 0.0
      %v2152 = vmax.f32 %v2070, 0.0
      %v2153 = vmax.f32 %v2075, 0.0
      %v2154 = vmax.f32 %v2078, 0.0
      %v2155 = vmax.f32 %v2083, 0.0
      %v2156 = vmax.f32 %v2086, 0.0
      %v2157 = vmax.f32 %v2091, 0.0
      %v2158 = vmax.f32 %v2094, 0.0
      %v2159 = vmax.f32 %v2099, 0.0
      %v2160 = vmax.f32 %v2102, 0.0
      %v2161 = vmax.f32 %v2107, 0.0
      %v2162 = vmax.f32 %v2110, 0.0
      %v2163 = vmax.f32 %v2115, 0.0
      %v2164 = vmax.f32 %v2118, 0.0
      %v2165 = vmax.f32 %v2123, 0.0
      %v2166 = vmax.f32 %v2126, 0.0
      %v2167 = vmax.f32 %v2131, 0.0
      %v2168 = vmax.f32 %v2134, 0.0
      %v2169 = vpack.c.bf16 %v2138, %v2137
      %v2170 = vpack.c.bf16 %v2140, %v2139
      %v2171 = vpack.c.bf16 %v2142, %v2141
      %v2172 = vpack.c.bf16 %v2144, %v2143
      %v2173 = vpack.c.bf16 %v2146, %v2145
      %v2174 = vpack.c.bf16 %v2148, %v2147
      %v2175 = vpack.c.bf16 %v2150, %v2149
      %v2176 = vpack.c.bf16 %v2152, %v2151
      %v2177 = vpack.c.bf16 %v2154, %v2153
      %v2178 = vpack.c.bf16 %v2156, %v2155
      %v2179 = vpack.c.bf16 %v2158, %v2157
      %v2180 = vpack.c.bf16 %v2160, %v2159
      %v2181 = vpack.c.bf16 %v2162, %v2161
      %v2182 = vpack.c.bf16 %v2164, %v2163
      %v2183 = vpack.c.bf16 %v2166, %v2165
      %v2184 = vpack.c.bf16 %v2168, %v2167
      %s2185 = scalar_lea.vmem %s1, 448
      %v2186 = vld [vmem:[%s2185] sm:$0xf]
      %v2187 = vld [vmem:[%s2185 + $0x4] sm:$0xf]
      %v2188 = vld [vmem:[%s2185 + $0x8] sm:$0xf]
      %v2189 = vld [vmem:[%s2185 + $0xc] sm:$0xf]
      %v2190 = vld [vmem:[%s2185 + $0x10] sm:$0xf]
      %v2191 = vld [vmem:[%s2185 + $0x14] sm:$0xf]
      %v2192 = vld [vmem:[%s2185 + $0x18] sm:$0xf]
      %v2193 = vld [vmem:[%s2185 + $0x1c] sm:$0xf]
      %v2194 = vld [vmem:[%s2185 + $0x20] sm:$0xf]
      %v2195 = vld [vmem:[%s2185 + $0x24] sm:$0xf]
      %v2196 = vld [vmem:[%s2185 + $0x28] sm:$0xf]
      %v2197 = vld [vmem:[%s2185 + $0x2c] sm:$0xf]
      %v2198 = vld [vmem:[%s2185 + $0x30] sm:$0xf]
      %v2199 = vld [vmem:[%s2185 + $0x34] sm:$0xf]
      %v2200 = vld [vmem:[%s2185 + $0x38] sm:$0xf]
      %v2201 = vld [vmem:[%s2185 + $0x3c] sm:$0xf]
      %s2202 = scalar_lea.vmem %s2, 7
      %v2203 = vld [vmem:[%s2202] sm:$0x1]
      %v2205 = vlaneseq
      %v2206 = vshrl.u32 %v2205, 7
      %v2207 = vsub.s32 0, %v2206
      %v2208 = vrot.slane %v2203, %v2207
      %v2226 = vunpack.c.l.b16 %v2186
      %v2227 = vunpack.c.l.b16 %v2187
      %v2228 = vunpack.c.l.b16 %v2188
      %v2229 = vunpack.c.l.b16 %v2189
      %v2230 = vunpack.c.l.b16 %v2190
      %v2231 = vunpack.c.l.b16 %v2191
      %v2232 = vunpack.c.l.b16 %v2192
      %v2233 = vunpack.c.l.b16 %v2193
      %v2234 = vunpack.c.l.b16 %v2194
      %v2235 = vunpack.c.l.b16 %v2195
      %v2236 = vunpack.c.l.b16 %v2196
      %v2237 = vunpack.c.l.b16 %v2197
      %v2238 = vunpack.c.l.b16 %v2198
      %v2239 = vunpack.c.l.b16 %v2199
      %v2240 = vunpack.c.l.b16 %v2200
      %v2241 = vunpack.c.l.b16 %v2201
      %v2242 = vpack.c.b16 %v2227, %v2226
      %v2243 = vpack.c.b16 %v2229, %v2228
      %v2244 = vpack.c.b16 %v2231, %v2230
      %v2245 = vpack.c.b16 %v2233, %v2232
      %v2246 = vpack.c.b16 %v2235, %v2234
      %v2247 = vpack.c.b16 %v2237, %v2236
      %v2248 = vpack.c.b16 %v2239, %v2238
      %v2249 = vpack.c.b16 %v2241, %v2240
      %2258 = vmatprep.subr.bf16.mxu0 0
      %2259 = vmatpush1.bf16.msra.mxu0 %v2242
      %2260 = vmatprep.subr.bf16.mxu0 0
      %2261 = vmatpush1.bf16.msra.mxu0 %v2243
      %2262 = vmatprep.subr.bf16.mxu0 0
      %2263 = vmatpush1.bf16.msra.mxu0 %v2244
      %2264 = vmatprep.subr.bf16.mxu0 0
      %2265 = vmatpush1.bf16.msra.mxu0 %v2245
      %2266 = vmatprep.subr.bf16.mxu0 0
      %2267 = vmatpush1.bf16.msra.mxu0 %v2246
      %2268 = vmatprep.subr.bf16.mxu0 0
      %2269 = vmatpush1.bf16.msra.mxu0 %v2247
      %2270 = vmatprep.subr.bf16.mxu0 0
      %2271 = vmatpush1.bf16.msra.mxu0 %v2248
      %2272 = vmatprep.subr.bf16.mxu0 0
      %2273 = vmatpush1.bf16.msra.mxu0 %v2249
      %2274 = vmatprep.subr.bf16.mxu0 0
      %2275 = vmatpush1.bf16.msra.mxu0 0
      %2276 = vmatprep.subr.bf16.mxu0 0
      %2277 = vmatpush1.bf16.msra.mxu0 0
      %2278 = vmatprep.subr.bf16.mxu0 0
      %2279 = vmatpush1.bf16.msra.mxu0 0
      %2280 = vmatprep.subr.bf16.mxu0 0
      %2281 = vmatpush1.bf16.msra.mxu0 0
      %2282 = vmatprep.subr.bf16.mxu0 0
      %2283 = vmatpush1.bf16.msra.mxu0 0
      %2284 = vmatprep.subr.bf16.mxu0 0
      %2285 = vmatpush1.bf16.msra.mxu0 0
      %2286 = vmatprep.subr.bf16.mxu0 0
      %2287 = vmatpush1.bf16.msra.mxu0 0
      %2288 = vmatprep.subr.bf16.mxu0 0
      %2289 = vmatpush1.bf16.msra.mxu0 0
      %2290 = vmatprep.mubr.bf16.mxu0 0
      %2291 = vmatmul.mubr.bf16.gmra.mrb[0].mxu0 %v2169
      %v2292 = vpop.f32.mrb[0].mxu0
      %v2293 = vadd.f32 %v2208, %v2292
      %v2294 = vpop.f32.mrb[0].mxu0
      %v2295 = vpop.f32.mrb[0].mxu0
      %v2296 = vadd.f32 %v2208, %v2295
      %v2297 = vpop.f32.mrb[0].mxu0
      %2298 = vmatprep.mubr.bf16.mxu0 0
      %2299 = vmatmul.mubr.bf16.gmra.mrb[0].mxu0 %v2170
      %v2300 = vpop.f32.mrb[0].mxu0
      %v2301 = vadd.f32 %v2208, %v2300
      %v2302 = vpop.f32.mrb[0].mxu0
      %v2303 = vpop.f32.mrb[0].mxu0
      %v2304 = vadd.f32 %v2208, %v2303
      %v2305 = vpop.f32.mrb[0].mxu0
      %2306 = vmatprep.mubr.bf16.mxu0 0
      %2307 = vmatmul.mubr.bf16.gmra.mrb[0].mxu0 %v2171
      %v2308 = vpop.f32.mrb[0].mxu0
      %v2309 = vadd.f32 %v2208, %v2308
      %v2310 = vpop.f32.mrb[0].mxu0
      %v2311 = vpop.f32.mrb[0].mxu0
      %v2312 = vadd.f32 %v2208, %v2311
      %v2313 = vpop.f32.mrb[0].mxu0
      %2314 = vmatprep.mubr.bf16.mxu0 0
      %2315 = vmatmul.mubr.bf16.gmra.mrb[0].mxu0 %v2172
      %v2316 = vpop.f32.mrb[0].mxu0
      %v2317 = vadd.f32 %v2208, %v2316
      %v2318 = vpop.f32.mrb[0].mxu0
      %v2319 = vpop.f32.mrb[0].mxu0
      %v2320 = vadd.f32 %v2208, %v2319
      %v2321 = vpop.f32.mrb[0].mxu0
      %2322 = vmatprep.mubr.bf16.mxu0 0
      %2323 = vmatmul.mubr.bf16.gmra.mrb[0].mxu0 %v2173
      %v2324 = vpop.f32.mrb[0].mxu0
      %v2325 = vadd.f32 %v2208, %v2324
      %v2326 = vpop.f32.mrb[0].mxu0
      %v2327 = vpop.f32.mrb[0].mxu0
      %v2328 = vadd.f32 %v2208, %v2327
      %v2329 = vpop.f32.mrb[0].mxu0
      %2330 = vmatprep.mubr.bf16.mxu0 0
      %2331 = vmatmul.mubr.bf16.gmra.mrb[0].mxu0 %v2174
      %v2332 = vpop.f32.mrb[0].mxu0
      %v2333 = vadd.f32 %v2208, %v2332
      %v2334 = vpop.f32.mrb[0].mxu0
      %v2335 = vpop.f32.mrb[0].mxu0
      %v2336 = vadd.f32 %v2208, %v2335
      %v2337 = vpop.f32.mrb[0].mxu0
      %2338 = vmatprep.mubr.bf16.mxu0 0
      %2339 = vmatmul.mubr.bf16.gmra.mrb[0].mxu0 %v2175
      %v2340 = vpop.f32.mrb[0].mxu0
      %v2341 = vadd.f32 %v2208, %v2340
      %v2342 = vpop.f32.mrb[0].mxu0
      %v2343 = vpop.f32.mrb[0].mxu0
      %v2344 = vadd.f32 %v2208, %v2343
      %v2345 = vpop.f32.mrb[0].mxu0
      %2346 = vmatprep.mubr.bf16.mxu0 0
      %2347 = vmatmul.mubr.bf16.gmra.mrb[0].mxu0 %v2176
      %v2348 = vpop.f32.mrb[0].mxu0
      %v2349 = vadd.f32 %v2208, %v2348
      %v2350 = vpop.f32.mrb[0].mxu0
      %v2351 = vpop.f32.mrb[0].mxu0
      %v2352 = vadd.f32 %v2208, %v2351
      %v2353 = vpop.f32.mrb[0].mxu0
      %2354 = vmatprep.mubr.bf16.mxu0 0
      %2355 = vmatmul.mubr.bf16.gmra.mrb[0].mxu0 %v2177
      %v2356 = vpop.f32.mrb[0].mxu0
      %v2357 = vadd.f32 %v2208, %v2356
      %v2358 = vpop.f32.mrb[0].mxu0
      %v2359 = vpop.f32.mrb[0].mxu0
      %v2360 = vadd.f32 %v2208, %v2359
      %v2361 = vpop.f32.mrb[0].mxu0
      %2362 = vmatprep.mubr.bf16.mxu0 0
      %2363 = vmatmul.mubr.bf16.gmra.mrb[0].mxu0 %v2178
      %v2364 = vpop.f32.mrb[0].mxu0
      %v2365 = vadd.f32 %v2208, %v2364
      %v2366 = vpop.f32.mrb[0].mxu0
      %v2367 = vpop.f32.mrb[0].mxu0
      %v2368 = vadd.f32 %v2208, %v2367
      %v2369 = vpop.f32.mrb[0].mxu0
      %2370 = vmatprep.mubr.bf16.mxu0 0
      %2371 = vmatmul.mubr.bf16.gmra.mrb[0].mxu0 %v2179
      %v2372 = vpop.f32.mrb[0].mxu0
      %v2373 = vadd.f32 %v2208, %v2372
      %v2374 = vpop.f32.mrb[0].mxu0
      %v2375 = vpop.f32.mrb[0].mxu0
      %v2376 = vadd.f32 %v2208, %v2375
      %v2377 = vpop.f32.mrb[0].mxu0
      %2378 = vmatprep.mubr.bf16.mxu0 0
      %2379 = vmatmul.mubr.bf16.gmra.mrb[0].mxu0 %v2180
      %v2380 = vpop.f32.mrb[0].mxu0
      %v2381 = vadd.f32 %v2208, %v2380
      %v2382 = vpop.f32.mrb[0].mxu0
      %v2383 = vpop.f32.mrb[0].mxu0
      %v2384 = vadd.f32 %v2208, %v2383
      %v2385 = vpop.f32.mrb[0].mxu0
      %2386 = vmatprep.mubr.bf16.mxu0 0
      %2387 = vmatmul.mubr.bf16.gmra.mrb[0].mxu0 %v2181
      %v2388 = vpop.f32.mrb[0].mxu0
      %v2389 = vadd.f32 %v2208, %v2388
      %v2390 = vpop.f32.mrb[0].mxu0
      %v2391 = vpop.f32.mrb[0].mxu0
      %v2392 = vadd.f32 %v2208, %v2391
      %v2393 = vpop.f32.mrb[0].mxu0
      %2394 = vmatprep.mubr.bf16.mxu0 0
      %2395 = vmatmul.mubr.bf16.gmra.mrb[0].mxu0 %v2182
      %v2396 = vpop.f32.mrb[0].mxu0
      %v2397 = vadd.f32 %v2208, %v2396
      %v2398 = vpop.f32.mrb[0].mxu0
      %v2399 = vpop.f32.mrb[0].mxu0
      %v2400 = vadd.f32 %v2208, %v2399
      %v2401 = vpop.f32.mrb[0].mxu0
      %2402 = vmatprep.mubr.bf16.mxu0 0
      %2403 = vmatmul.mubr.bf16.gmra.mrb[0].mxu0 %v2183
      %v2404 = vpop.f32.mrb[0].mxu0
      %v2405 = vadd.f32 %v2208, %v2404
      %v2406 = vpop.f32.mrb[0].mxu0
      %v2407 = vpop.f32.mrb[0].mxu0
      %v2408 = vadd.f32 %v2208, %v2407
      %v2409 = vpop.f32.mrb[0].mxu0
      %2410 = vmatprep.mubr.bf16.mxu0 0
      %2411 = vmatmul.mubr.bf16.gmra.mrb[0].mxu0 %v2184
      %v2412 = vpop.f32.mrb[0].mxu0
      %v2413 = vadd.f32 %v2208, %v2412
      %v2414 = vpop.f32.mrb[0].mxu0
      %v2415 = vpop.f32.mrb[0].mxu0
      %v2416 = vadd.f32 %v2208, %v2415
      %v2417 = vpop.f32.mrb[0].mxu0
      %2418 = vdwg.mxu0
      %2419 = vst [vmem:[%s172] sm:$0xff] %v2293
      %2420 = vst [vmem:[%s172 + $0x8] sm:$0xff] %v2296
      %2421 = vst [vmem:[%s172 + $0x10] sm:$0xff] %v2301
      %2422 = vst [vmem:[%s172 + $0x18] sm:$0xff] %v2304
      %2423 = vst [vmem:[%s172 + $0x20] sm:$0xff] %v2309
      %2424 = vst [vmem:[%s172 + $0x28] sm:$0xff] %v2312
      %2425 = vst [vmem:[%s172 + $0x30] sm:$0xff] %v2317
      %2426 = vst [vmem:[%s172 + $0x38] sm:$0xff] %v2320
      %2427 = vst [vmem:[%s172 + $0x40] sm:$0xff] %v2325
      %2428 = vst [vmem:[%s172 + $0x48] sm:$0xff] %v2328
      %2429 = vst [vmem:[%s172 + $0x50] sm:$0xff] %v2333
      %2430 = vst [vmem:[%s172 + $0x58] sm:$0xff] %v2336
      %2431 = vst [vmem:[%s172 + $0x60] sm:$0xff] %v2341
      %2432 = vst [vmem:[%s172 + $0x68] sm:$0xff] %v2344
      %2433 = vst [vmem:[%s172 + $0x70] sm:$0xff] %v2349
      %2434 = vst [vmem:[%s172 + $0x78] sm:$0xff] %v2352
      %2435 = vst [vmem:[%s172 + $0x80] sm:$0xff] %v2357
      %2436 = vst [vmem:[%s172 + $0x88] sm:$0xff] %v2360
      %2437 = vst [vmem:[%s172 + $0x90] sm:$0xff] %v2365
      %2438 = vst [vmem:[%s172 + $0x98] sm:$0xff] %v2368
      %2439 = vst [vmem:[%s172 + $0xa0] sm:$0xff] %v2373
      %2440 = vst [vmem:[%s172 + $0xa8] sm:$0xff] %v2376
      %2441 = vst [vmem:[%s172 + $0xb0] sm:$0xff] %v2381
      %2442 = vst [vmem:[%s172 + $0xb8] sm:$0xff] %v2384
      %2443 = vst [vmem:[%s172 + $0xc0] sm:$0xff] %v2389
      %2444 = vst [vmem:[%s172 + $0xc8] sm:$0xff] %v2392
      %2445 = vst [vmem:[%s172 + $0xd0] sm:$0xff] %v2397
      %2446 = vst [vmem:[%s172 + $0xd8] sm:$0xff] %v2400
      %2447 = vst [vmem:[%s172 + $0xe0] sm:$0xff] %v2405
      %2448 = vst [vmem:[%s172 + $0xe8] sm:$0xff] %v2408
      %2449 = vst [vmem:[%s172 + $0xf0] sm:$0xff] %v2413
      %2450 = vst [vmem:[%s172 + $0xf8] sm:$0xff] %v2416
      %s2451 = smul.u32 32, %s14
      %p2452 = scmp.lt.s32.totalorder %s2451, 63
      %s2453 = scalar_select %p2452, %s2451, 63
      %s2454 = smul.addr %s2453, 8
      %s2455 = scalar_lea.vmem %s3, %s2454
      // Predicated region
      $region33: #{actor_forward.1} parent=31 // pred_check
        %p2456 = pneg %p100
      $region34: #{actor_forward.1} parent=31 // pred_check_branch
        %2458 = sbr.rel (%p2456) target = $region36
      $region35: #{actor_forward.1} parent=31 // pred_region
        %s2459 = smul.u32 32, %s14
      $region36: #{actor_forward.1} parent=31 // pred_fallthru
        _
    $region32: #{actor_forward.1} parent=5 // pred_fallthru
      _
    %p2460 = scmp.le.s32.totalorder 2, %s9
    // Predicated region
    $region37: #{actor_forward.1} parent=5 // pred_check
      %p2461 = pneg %p2460
    $region38: #{actor_forward.1} parent=5 // pred_check_branch
      %2463 = sbr.rel (%p2461) target = $region40
    $region39: #{actor_forward.1} parent=5 // pred_region
      %s2464 = ssub.s32 %s9, 2
      // Predicated region
      $region41: #{actor_forward.1} parent=39 // pred_check
        %p2465 = pneg %p106
      $region42: #{actor_forward.1} parent=39 // pred_check_branch
        %2467 = sbr.rel (%p2465) target = $region44
      $region43: #{actor_forward.1} parent=39 // pred_region
        %s2468 = smul.u32 32, %s15
        %p2469 = scmp.lt.s32.totalorder %s2468, 63
        %s2470 = scalar_select %p2469, %s2468, 63
        %s2471 = smul.addr %s2470, 8
        %s2472 = scalar_lea.vmem %s3, %s2471
      $region44: #{actor_forward.1} parent=39 // pred_fallthru
        _
    $region40: #{actor_forward.1} parent=5 // pred_fallthru
      _
  $region6: #{actor_forward.1} parent=0 // loop_footer
    %s13 = sadd.s32 1, %s9
  $region7: #{actor_forward.1} parent=0 // loop_footer_branch
    %8 = sbr.rel target = $region3
  $region8: #{actor_forward.1} parent=0 // loop_exit
    _

</llo_original>
